<compile_context>
chip_gen: v5e
topology: v5e:2x2
jax: 0.10.0
libtpu: 0.0.40
codegen_flags: <defaults>
</compile_context>

<pallas_src>
import functools

import jax
import jax.numpy as jnp
from jax import lax
from jax.experimental import pallas as pl
from jax.experimental.pallas import tpu as pltpu

EXPANSION = 4
EPS = 1e-5


def _bottleneck_kernel(x_ref, w1_ref, b1_ref, w2_ref, b2_ref, w3_ref, b3_ref,
                       *rest, H, W, Cin, C, stride, project):
    """One grid step = one image.  All convs expressed as MXU matmuls."""
    if project:
        ws_ref, o_ref = rest
    else:
        (o_ref,) = rest

    C4 = C * EXPANSION
    s = stride
    Ho = (H - 1) // s + 1
    Wo = (W - 1) // s + 1

    # ---- conv1: 1x1 (Cin -> C); BN scale folded into w1; bias + ReLU -------
    x2d = x_ref[0]                                      # (H*W, Cin) f32, matmul-ready
    x_bf = x2d.astype(jnp.bfloat16)
    h1 = jnp.dot(x_bf, w1_ref[...], preferred_element_type=jnp.float32)
    h1 = jnp.maximum(h1 + b1_ref[...], 0.0).astype(jnp.bfloat16)   # (H*W, C)

    # ---- conv2: 3x3 stride=s pad=1 (C -> C) as 9 accumulated matmuls --------
    # Single zero-pad of h1 (W pad = one sublane-relayout pass, H pad = cheap
    # slow-axis concat), then:
    #   * 3 column planes, one per kw (strided slice only when s > 1),
    #   * 9 cheap leading-axis row slices,
    #   * 9 K=C matmuls accumulated into one f32 accumulator.
    h1_3 = h1.reshape(H, W, C)
    zcol = jnp.zeros((H, 1, C), jnp.bfloat16)
    zrow = jnp.zeros((1, W + 2, C), jnp.bfloat16)
    padded = jnp.concatenate([zcol, h1_3, zcol], axis=1)      # (H,   W+2, C)
    padded = jnp.concatenate([zrow, padded, zrow], axis=0)    # (H+2, W+2, C)

    acc = jnp.zeros((Ho * Wo, C), jnp.float32)
    for kw in range(3):
        # Column plane for this kw: padded[:, kw + s*wo, :] for wo in [0, Wo).
        plane = lax.slice(padded, (0, kw, 0),
                          (H + 2, kw + s * (Wo - 1) + 1, C),
                          (1, s, 1))                          # (H+2, Wo, C)
        if s == 1:
            plane2d = plane.reshape((H + 2) * Wo, C)
        for kh in range(3):
            if s == 1:
                # rows kh + ho  ->  contiguous flat rows [kh*Wo, kh*Wo + Ho*Wo)
                tap = plane2d[kh * Wo:(kh + Ho) * Wo, :]
            else:
                t3 = lax.slice(plane, (kh, 0, 0),
                               (kh + s * (Ho - 1) + 1, Wo, C),
                               (s, 1, 1))                     # (Ho, Wo, C)
                tap = t3.reshape(Ho * Wo, C)
            acc = acc + jnp.dot(tap, w2_ref[kh * 3 + kw],
                                preferred_element_type=jnp.float32)

    h2 = jnp.maximum(acc + b2_ref[...], 0.0).astype(jnp.bfloat16)   # (Ho*Wo, C)

    # ---- conv3: 1x1 (C -> 4C) + shortcut ------------------------------------
    out = jnp.dot(h2, w3_ref[...], preferred_element_type=jnp.float32)
    out = out + b3_ref[...]                      # b3 includes shortcut BN bias
    if project:
        if s == 1:
            xs = x_bf                                        # (H*W, Cin)
        else:
            x3 = x_bf.reshape(H, W, Cin)
            x3 = lax.slice(x3, (0, 0, 0),
                           (s * (Ho - 1) + 1, s * (Wo - 1) + 1, Cin),
                           (s, s, 1))
            xs = x3.reshape(Ho * Wo, Cin)
        out = out + jnp.dot(xs, ws_ref[...], preferred_element_type=jnp.float32)
    else:
        out = out + x2d                          # identity shortcut in full f32

    out = jnp.maximum(out, 0.0)
    o_ref[...] = out.reshape(1, Ho * Wo, C4).astype(o_ref.dtype)


def _fold_params(params, C, project):
    """Fold eval-mode BN scales into conv weights; fold shortcut bias into b3."""
    w1 = (params["w1"] * params["s1"][0]).astype(jnp.bfloat16)            # (Cin, C)
    b1 = params["b1"].astype(jnp.float32)                                 # (1, C)
    w2 = (params["w2"] * params["s2"][0]).reshape(9, C, C).astype(jnp.bfloat16)
    b2 = params["b2"].astype(jnp.float32)
    w3 = (params["w3"] * params["s3"][0]).astype(jnp.bfloat16)            # (C, 4C)
    b3 = params["b3"]
    ws = None
    if project:
        ws = (params["ws"] * params["ss"][0]).astype(jnp.bfloat16)        # (Cin, 4C)
        b3 = b3 + params["bs"]
    return w1, b1, w2, b2, w3, b3.astype(jnp.float32), ws


def bottleneck_forward(x_nhwc, params, *, stride):
    N, H, W, Cin = x_nhwc.shape
    C = params["w1"].shape[1]
    C4 = C * EXPANSION
    Ho = (H - 1) // stride + 1
    Wo = (W - 1) // stride + 1
    project = (stride != 1) or (Cin != C4)

    w1, b1, w2, b2, w3, b3, ws = _fold_params(params, C, project)

    # f32 input straight from HBM, presented as (N, H*W, Cin) so the DMA
    # delivers the matmul-ready (rows, channels) layout (no in-kernel
    # lane->sublane relayout, no extra wrapper cast pass).
    x_flat = x_nhwc.reshape(N, H * W, Cin)

    args = [x_flat, w1, b1, w2, b2, w3, b3]
    if project:
        args.append(ws)

    def resident_spec(a):
        # Constant block index => fetched once, resident across the grid.
        return pl.BlockSpec(a.shape, lambda n, nd=a.ndim: (0,) * nd)

    in_specs = ([pl.BlockSpec((1, H * W, Cin), lambda n: (n, 0, 0))]
                + [resident_spec(a) for a in args[1:]])

    kernel = functools.partial(_bottleneck_kernel, H=H, W=W, Cin=Cin, C=C,
                               stride=stride, project=project)

    # VMEM budget from the actual footprint (pipelined blocks x 2 buffers +
    # resident weights x 2 + in-kernel intermediates), clamped to a range that
    # is safe on every generation (v7x has only 64 MiB physical VMEM).
    def nbytes(a):
        return int(a.size) * a.dtype.itemsize
    blk_bytes = 2 * (H * W * Cin * 4 + Ho * Wo * C4 * 2)
    wgt_bytes = 2 * sum(nbytes(a) for a in args[1:])
    inter_bytes = ((H + 2) * (W + 2) * C * 2 * 3        # h1 / padded / planes (bf16)
                   + Ho * Wo * (C + C4) * 4 * 2)        # acc / h2 / out (f32)
    vmem_limit = int(min(48 * 2**20,
                         max(16 * 2**20, 2 * (blk_bytes + wgt_bytes + inter_bytes))))

    out = pl.pallas_call(
        kernel,
        out_shape=jax.ShapeDtypeStruct((N, Ho * Wo, C4), jnp.bfloat16),
        grid_spec=pltpu.PrefetchScalarGridSpec(
            num_scalar_prefetch=0,
            grid=(N,),
            in_specs=in_specs,
            out_specs=pl.BlockSpec((1, Ho * Wo, C4), lambda n: (n, 0, 0)),
        ),
        compiler_params=pltpu.CompilerParams(
            dimension_semantics=("parallel",),          # megacore over batch
            vmem_limit_bytes=vmem_limit),
    )(*args)
    return out.reshape(N, Ho, Wo, C4)


def init_params(key, in_channels, out_channels):
    """Deterministic synthetic parameters; BN folded to (scale, bias)."""
    C = out_channels
    C4 = C * EXPANSION
    keys = jax.random.split(key, 8)

    def conv_w(k, shape, fan_in):
        return jax.random.normal(k, shape, jnp.float32) / jnp.sqrt(float(fan_in))

    def bn_fold(k, c):
        k1, k2, k3, k4 = jax.random.split(k, 4)
        gamma = 1.0 + 0.1 * jax.random.normal(k1, (c,), jnp.float32)
        beta = 0.1 * jax.random.normal(k2, (c,), jnp.float32)
        mean = 0.1 * jax.random.normal(k3, (c,), jnp.float32)
        var = 0.5 + jnp.abs(jax.random.normal(k4, (c,), jnp.float32))
        scale = gamma / jnp.sqrt(var + EPS)
        bias = beta - mean * scale
        return scale.reshape(1, c), bias.reshape(1, c)

    p = {}
    p["w1"] = conv_w(keys[0], (in_channels, C), in_channels)          # 1x1
    p["s1"], p["b1"] = bn_fold(keys[1], C)
    p["w2"] = conv_w(keys[2], (3, 3, C, C), 9 * C)                    # 3x3 HWIO
    p["s2"], p["b2"] = bn_fold(keys[3], C)
    p["w3"] = conv_w(keys[4], (C, C4), C)                             # 1x1
    p["s3"], p["b3"] = bn_fold(keys[5], C4)
    p["ws"] = conv_w(keys[6], (in_channels, C4), in_channels)         # shortcut 1x1
    p["ss"], p["bs"] = bn_fold(keys[7], C4)
    return p


def ref_forward(x_nchw, params, stride):
    """Plain-JAX NCHW reference mirroring the PyTorch forward (eval-mode BN)."""
    def conv(x, w_oihw, s, pad):
        return lax.conv_general_dilated(
            x, w_oihw, (s, s), pad,
            dimension_numbers=("NCHW", "OIHW", "NCHW"),
            precision=lax.Precision.HIGHEST)

    def bn(x, scale, bias):
        return x * scale.reshape(1, -1, 1, 1) + bias.reshape(1, -1, 1, 1)

    Cin = x_nchw.shape[1]
    C = params["w1"].shape[1]
    C4 = C * EXPANSION
    project = (stride != 1) or (Cin != C4)

    w1 = params["w1"].T[:, :, None, None]                 # (O, I, 1, 1)
    w2 = jnp.transpose(params["w2"], (3, 2, 0, 1))        # HWIO -> OIHW
    w3 = params["w3"].T[:, :, None, None]

    h = jax.nn.relu(bn(conv(x_nchw, w1, 1, "VALID"),
                       params["s1"][0], params["b1"][0]))
    h = jax.nn.relu(bn(conv(h, w2, stride, [(1, 1), (1, 1)]),
                       params["s2"][0], params["b2"][0]))
    h = bn(conv(h, w3, 1, "VALID"), params["s3"][0], params["b3"][0])

    if project:
        ws = params["ws"].T[:, :, None, None]
        sc = bn(conv(x_nchw, ws, stride, "VALID"),
                params["ss"][0], params["bs"][0])
    else:
        sc = x_nchw
    return jax.nn.relu(h + sc)


if __name__ == "__main__":
    key = jax.random.PRNGKey(0)
    kx, kp = jax.random.split(key)

    # Small but MXU-representative shapes: NCHW input, bottleneck width 32,
    # block output channels = 4*32 = 128 (lane-dense output stores).
    N, Cin, H, W = 2, 64, 16, 16
    C_out = 32

    x_nchw = jax.random.normal(kx, (N, Cin, H, W), jnp.float32)
    params = init_params(kp, Cin, C_out)
    x_nhwc = jnp.transpose(x_nchw, (0, 2, 3, 1))          # kernel works in NHWC

    # stride=1 (projection because Cin != 4*C_out) and stride=2 (downsampling,
    # parity-plane conv2 path + strided projection shortcut).
    for stride in (1, 2):
        out_nhwc = bottleneck_forward(x_nhwc, params, stride=stride)
        out_nhwc = jax.block_until_ready(out_nhwc)
        out_nchw = jnp.transpose(out_nhwc.astype(jnp.float32), (0, 3, 1, 2))

        ref = ref_forward(x_nchw, params, stride)
        assert out_nchw.shape == ref.shape, (out_nchw.shape, ref.shape)
        err = float(jnp.max(jnp.abs(out_nchw - ref)))
        scale = float(jnp.max(jnp.abs(ref)))
        # bf16 MXU operands + bf16 output vs an f32 HIGHEST-precision reference
        # => compare with a relative (scale-aware) tolerance.
        tol = 3e-2 * max(1.0, scale)
        assert err <= tol, f"stride={stride}: max abs err {err} > tol {tol}"

    print("KERNEL_OK")
</pallas_src>

<mosaic_0001>
module attributes {stable_mosaic.version = 11 : i64} {
  func.func @_bottleneck_kernel(%arg0: i32, %arg1: memref<1x256x64xf32, #tpu.memory_space<vmem>>, %arg2: memref<64x32xbf16, #tpu.memory_space<vmem>>, %arg3: memref<1x32xf32, #tpu.memory_space<vmem>>, %arg4: memref<9x32x32xbf16, #tpu.memory_space<vmem>>, %arg5: memref<1x32xf32, #tpu.memory_space<vmem>>, %arg6: memref<32x128xbf16, #tpu.memory_space<vmem>>, %arg7: memref<1x128xf32, #tpu.memory_space<vmem>>, %arg8: memref<64x128xbf16, #tpu.memory_space<vmem>>, %arg9: memref<1x256x128xbf16, #tpu.memory_space<vmem>>) attributes {dimension_semantics = [#tpu.dimension_semantics<parallel>], iteration_bounds = array<i64: 2>, scalar_prefetch = 0 : i64, scratch_operands = 0 : i64, tpu.core_type = #tpu.core_type<tc>, window_params = [{transform_indices = @transform_0, window_bounds = array<i64: 1, 256, 64>}, {pipeline_mode = #tpu.pipeline_mode<synchronous>, transform_indices = @transform_1, window_bounds = array<i64: 64, 32>}, {pipeline_mode = #tpu.pipeline_mode<synchronous>, transform_indices = @transform_2, window_bounds = array<i64: 1, 32>}, {pipeline_mode = #tpu.pipeline_mode<synchronous>, transform_indices = @transform_3, window_bounds = array<i64: 9, 32, 32>}, {pipeline_mode = #tpu.pipeline_mode<synchronous>, transform_indices = @transform_4, window_bounds = array<i64: 1, 32>}, {pipeline_mode = #tpu.pipeline_mode<synchronous>, transform_indices = @transform_5, window_bounds = array<i64: 32, 128>}, {pipeline_mode = #tpu.pipeline_mode<synchronous>, transform_indices = @transform_6, window_bounds = array<i64: 1, 128>}, {pipeline_mode = #tpu.pipeline_mode<synchronous>, transform_indices = @transform_7, window_bounds = array<i64: 64, 128>}, {transform_indices = @transform_8, window_bounds = array<i64: 1, 256, 128>}]} {
    %c0 = arith.constant 0 : index
    %c0_0 = arith.constant 0 : index
    %c0_1 = arith.constant 0 : index
    %0 = vector.load %arg1[%c0, %c0_0, %c0_1] : memref<1x256x64xf32, #tpu.memory_space<vmem>>, vector<1x256x64xf32>
    %1 = vector.shape_cast %0 : vector<1x256x64xf32> to vector<256x64xf32>
    %2 = arith.truncf %1 : vector<256x64xf32> to vector<256x64xbf16>
    %c0_2 = arith.constant 0 : index
    %c0_3 = arith.constant 0 : index
    %3 = vector.load %arg2[%c0_2, %c0_3] : memref<64x32xbf16, #tpu.memory_space<vmem>>, vector<64x32xbf16>
    %cst = arith.constant dense<0.000000e+00> : vector<256x32xf32>
    %4 = tpu.matmul %2, %3, %cst {dimension_numbers = #tpu.dot_dimension_numbers<[1], [0], [0], [1], [0, 0, 1, 1], [], []>} : vector<256x64xbf16>, vector<64x32xbf16>, vector<256x32xf32> -> vector<256x32xf32>
    %c0_4 = arith.constant 0 : index
    %c0_5 = arith.constant 0 : index
    %5 = vector.load %arg3[%c0_4, %c0_5] : memref<1x32xf32, #tpu.memory_space<vmem>>, vector<1x32xf32>
    %6 = vector.broadcast %5 : vector<1x32xf32> to vector<256x32xf32>
    %7 = arith.addf %4, %6 : vector<256x32xf32>
    %cst_6 = arith.constant 0.000000e+00 : f32
    %8 = vector.broadcast %cst_6 : f32 to vector<256x32xf32>
    %9 = arith.maximumf %7, %8 : vector<256x32xf32>
    %10 = arith.truncf %9 : vector<256x32xf32> to vector<256x32xbf16>
    %11 = vector.shape_cast %10 : vector<256x32xbf16> to vector<16x16x32xbf16>
    %cst_7 = arith.constant 0.000000e+00 : bf16
    %12 = vector.broadcast %cst_7 : bf16 to vector<16x1x32xbf16>
    %cst_8 = arith.constant 0.000000e+00 : bf16
    %13 = vector.broadcast %cst_8 : bf16 to vector<1x18x32xbf16>
    %14 = tpu.concatenate %12, %11, %12 in 1 : vector<16x1x32xbf16>, vector<16x16x32xbf16>, vector<16x1x32xbf16> -> vector<16x18x32xbf16>
    %15 = tpu.concatenate %13, %14, %13 in 0 : vector<1x18x32xbf16>, vector<16x18x32xbf16>, vector<1x18x32xbf16> -> vector<18x18x32xbf16>
    %cst_9 = arith.constant 0.000000e+00 : f32
    %16 = vector.broadcast %cst_9 : f32 to vector<256x32xf32>
    %17 = vector.extract_strided_slice %15 {offsets = [0, 0, 0], sizes = [18, 16, 32], strides = [1, 1, 1]} : vector<18x18x32xbf16> to vector<18x16x32xbf16>
    %18 = vector.shape_cast %17 : vector<18x16x32xbf16> to vector<288x32xbf16>
    %19 = vector.extract_strided_slice %18 {offsets = [0, 0], sizes = [256, 32], strides = [1, 1]} : vector<288x32xbf16> to vector<256x32xbf16>
    %c0_10 = arith.constant 0 : index
    %c0_11 = arith.constant 0 : index
    %c0_12 = arith.constant 0 : index
    %20 = vector.load %arg4[%c0_10, %c0_11, %c0_12] : memref<9x32x32xbf16, #tpu.memory_space<vmem>>, vector<1x32x32xbf16>
    %21 = vector.shape_cast %20 : vector<1x32x32xbf16> to vector<32x32xbf16>
    %cst_13 = arith.constant dense<0.000000e+00> : vector<256x32xf32>
    %22 = tpu.matmul %19, %21, %cst_13 {dimension_numbers = #tpu.dot_dimension_numbers<[1], [0], [0], [1], [0, 0, 1, 1], [], []>} : vector<256x32xbf16>, vector<32x32xbf16>, vector<256x32xf32> -> vector<256x32xf32>
    %23 = arith.addf %16, %22 : vector<256x32xf32>
    %24 = vector.extract_strided_slice %18 {offsets = [16, 0], sizes = [256, 32], strides = [1, 1]} : vector<288x32xbf16> to vector<256x32xbf16>
    %c3 = arith.constant 3 : index
    %c0_14 = arith.constant 0 : index
    %c0_15 = arith.constant 0 : index
    %25 = vector.load %arg4[%c3, %c0_14, %c0_15] : memref<9x32x32xbf16, #tpu.memory_space<vmem>>, vector<1x32x32xbf16>
    %26 = vector.shape_cast %25 : vector<1x32x32xbf16> to vector<32x32xbf16>
    %cst_16 = arith.constant dense<0.000000e+00> : vector<256x32xf32>
    %27 = tpu.matmul %24, %26, %cst_16 {dimension_numbers = #tpu.dot_dimension_numbers<[1], [0], [0], [1], [0, 0, 1, 1], [], []>} : vector<256x32xbf16>, vector<32x32xbf16>, vector<256x32xf32> -> vector<256x32xf32>
    %28 = arith.addf %23, %27 : vector<256x32xf32>
    %29 = vector.extract_strided_slice %18 {offsets = [32, 0], sizes = [256, 32], strides = [1, 1]} : vector<288x32xbf16> to vector<256x32xbf16>
    %c6 = arith.constant 6 : index
    %c0_17 = arith.constant 0 : index
    %c0_18 = arith.constant 0 : index
    %30 = vector.load %arg4[%c6, %c0_17, %c0_18] : memref<9x32x32xbf16, #tpu.memory_space<vmem>>, vector<1x32x32xbf16>
    %31 = vector.shape_cast %30 : vector<1x32x32xbf16> to vector<32x32xbf16>
    %cst_19 = arith.constant dense<0.000000e+00> : vector<256x32xf32>
    %32 = tpu.matmul %29, %31, %cst_19 {dimension_numbers = #tpu.dot_dimension_numbers<[1], [0], [0], [1], [0, 0, 1, 1], [], []>} : vector<256x32xbf16>, vector<32x32xbf16>, vector<256x32xf32> -> vector<256x32xf32>
    %33 = arith.addf %28, %32 : vector<256x32xf32>
    %34 = vector.extract_strided_slice %15 {offsets = [0, 1, 0], sizes = [18, 16, 32], strides = [1, 1, 1]} : vector<18x18x32xbf16> to vector<18x16x32xbf16>
    %35 = vector.shape_cast %34 : vector<18x16x32xbf16> to vector<288x32xbf16>
    %36 = vector.extract_strided_slice %35 {offsets = [0, 0], sizes = [256, 32], strides = [1, 1]} : vector<288x32xbf16> to vector<256x32xbf16>
    %c1 = arith.constant 1 : index
    %c0_20 = arith.constant 0 : index
    %c0_21 = arith.constant 0 : index
    %37 = vector.load %arg4[%c1, %c0_20, %c0_21] : memref<9x32x32xbf16, #tpu.memory_space<vmem>>, vector<1x32x32xbf16>
    %38 = vector.shape_cast %37 : vector<1x32x32xbf16> to vector<32x32xbf16>
    %cst_22 = arith.constant dense<0.000000e+00> : vector<256x32xf32>
    %39 = tpu.matmul %36, %38, %cst_22 {dimension_numbers = #tpu.dot_dimension_numbers<[1], [0], [0], [1], [0, 0, 1, 1], [], []>} : vector<256x32xbf16>, vector<32x32xbf16>, vector<256x32xf32> -> vector<256x32xf32>
    %40 = arith.addf %33, %39 : vector<256x32xf32>
    %41 = vector.extract_strided_slice %35 {offsets = [16, 0], sizes = [256, 32], strides = [1, 1]} : vector<288x32xbf16> to vector<256x32xbf16>
    %c4 = arith.constant 4 : index
    %c0_23 = arith.constant 0 : index
    %c0_24 = arith.constant 0 : index
    %42 = vector.load %arg4[%c4, %c0_23, %c0_24] : memref<9x32x32xbf16, #tpu.memory_space<vmem>>, vector<1x32x32xbf16>
    %43 = vector.shape_cast %42 : vector<1x32x32xbf16> to vector<32x32xbf16>
    %cst_25 = arith.constant dense<0.000000e+00> : vector<256x32xf32>
    %44 = tpu.matmul %41, %43, %cst_25 {dimension_numbers = #tpu.dot_dimension_numbers<[1], [0], [0], [1], [0, 0, 1, 1], [], []>} : vector<256x32xbf16>, vector<32x32xbf16>, vector<256x32xf32> -> vector<256x32xf32>
    %45 = arith.addf %40, %44 : vector<256x32xf32>
    %46 = vector.extract_strided_slice %35 {offsets = [32, 0], sizes = [256, 32], strides = [1, 1]} : vector<288x32xbf16> to vector<256x32xbf16>
    %c7 = arith.constant 7 : index
    %c0_26 = arith.constant 0 : index
    %c0_27 = arith.constant 0 : index
    %47 = vector.load %arg4[%c7, %c0_26, %c0_27] : memref<9x32x32xbf16, #tpu.memory_space<vmem>>, vector<1x32x32xbf16>
    %48 = vector.shape_cast %47 : vector<1x32x32xbf16> to vector<32x32xbf16>
    %cst_28 = arith.constant dense<0.000000e+00> : vector<256x32xf32>
    %49 = tpu.matmul %46, %48, %cst_28 {dimension_numbers = #tpu.dot_dimension_numbers<[1], [0], [0], [1], [0, 0, 1, 1], [], []>} : vector<256x32xbf16>, vector<32x32xbf16>, vector<256x32xf32> -> vector<256x32xf32>
    %50 = arith.addf %45, %49 : vector<256x32xf32>
    %51 = vector.extract_strided_slice %15 {offsets = [0, 2, 0], sizes = [18, 16, 32], strides = [1, 1, 1]} : vector<18x18x32xbf16> to vector<18x16x32xbf16>
    %52 = vector.shape_cast %51 : vector<18x16x32xbf16> to vector<288x32xbf16>
    %53 = vector.extract_strided_slice %52 {offsets = [0, 0], sizes = [256, 32], strides = [1, 1]} : vector<288x32xbf16> to vector<256x32xbf16>
    %c2 = arith.constant 2 : index
    %c0_29 = arith.constant 0 : index
    %c0_30 = arith.constant 0 : index
    %54 = vector.load %arg4[%c2, %c0_29, %c0_30] : memref<9x32x32xbf16, #tpu.memory_space<vmem>>, vector<1x32x32xbf16>
    %55 = vector.shape_cast %54 : vector<1x32x32xbf16> to vector<32x32xbf16>
    %cst_31 = arith.constant dense<0.000000e+00> : vector<256x32xf32>
    %56 = tpu.matmul %53, %55, %cst_31 {dimension_numbers = #tpu.dot_dimension_numbers<[1], [0], [0], [1], [0, 0, 1, 1], [], []>} : vector<256x32xbf16>, vector<32x32xbf16>, vector<256x32xf32> -> vector<256x32xf32>
    %57 = arith.addf %50, %56 : vector<256x32xf32>
    %58 = vector.extract_strided_slice %52 {offsets = [16, 0], sizes = [256, 32], strides = [1, 1]} : vector<288x32xbf16> to vector<256x32xbf16>
    %c5 = arith.constant 5 : index
    %c0_32 = arith.constant 0 : index
    %c0_33 = arith.constant 0 : index
    %59 = vector.load %arg4[%c5, %c0_32, %c0_33] : memref<9x32x32xbf16, #tpu.memory_space<vmem>>, vector<1x32x32xbf16>
    %60 = vector.shape_cast %59 : vector<1x32x32xbf16> to vector<32x32xbf16>
    %cst_34 = arith.constant dense<0.000000e+00> : vector<256x32xf32>
    %61 = tpu.matmul %58, %60, %cst_34 {dimension_numbers = #tpu.dot_dimension_numbers<[1], [0], [0], [1], [0, 0, 1, 1], [], []>} : vector<256x32xbf16>, vector<32x32xbf16>, vector<256x32xf32> -> vector<256x32xf32>
    %62 = arith.addf %57, %61 : vector<256x32xf32>
    %63 = vector.extract_strided_slice %52 {offsets = [32, 0], sizes = [256, 32], strides = [1, 1]} : vector<288x32xbf16> to vector<256x32xbf16>
    %c8 = arith.constant 8 : index
    %c0_35 = arith.constant 0 : index
    %c0_36 = arith.constant 0 : index
    %64 = vector.load %arg4[%c8, %c0_35, %c0_36] : memref<9x32x32xbf16, #tpu.memory_space<vmem>>, vector<1x32x32xbf16>
    %65 = vector.shape_cast %64 : vector<1x32x32xbf16> to vector<32x32xbf16>
    %cst_37 = arith.constant dense<0.000000e+00> : vector<256x32xf32>
    %66 = tpu.matmul %63, %65, %cst_37 {dimension_numbers = #tpu.dot_dimension_numbers<[1], [0], [0], [1], [0, 0, 1, 1], [], []>} : vector<256x32xbf16>, vector<32x32xbf16>, vector<256x32xf32> -> vector<256x32xf32>
    %67 = arith.addf %62, %66 : vector<256x32xf32>
    %c0_38 = arith.constant 0 : index
    %c0_39 = arith.constant 0 : index
    %68 = vector.load %arg5[%c0_38, %c0_39] : memref<1x32xf32, #tpu.memory_space<vmem>>, vector<1x32xf32>
    %69 = vector.broadcast %68 : vector<1x32xf32> to vector<256x32xf32>
    %70 = arith.addf %67, %69 : vector<256x32xf32>
    %cst_40 = arith.constant 0.000000e+00 : f32
    %71 = vector.broadcast %cst_40 : f32 to vector<256x32xf32>
    %72 = arith.maximumf %70, %71 : vector<256x32xf32>
    %73 = arith.truncf %72 : vector<256x32xf32> to vector<256x32xbf16>
    %c0_41 = arith.constant 0 : index
    %c0_42 = arith.constant 0 : index
    %74 = vector.load %arg6[%c0_41, %c0_42] : memref<32x128xbf16, #tpu.memory_space<vmem>>, vector<32x128xbf16>
    %cst_43 = arith.constant dense<0.000000e+00> : vector<256x128xf32>
    %75 = tpu.matmul %73, %74, %cst_43 {dimension_numbers = #tpu.dot_dimension_numbers<[1], [0], [0], [1], [0, 0, 1, 1], [], []>} : vector<256x32xbf16>, vector<32x128xbf16>, vector<256x128xf32> -> vector<256x128xf32>
    %c0_44 = arith.constant 0 : index
    %c0_45 = arith.constant 0 : index
    %76 = vector.load %arg7[%c0_44, %c0_45] : memref<1x128xf32, #tpu.memory_space<vmem>>, vector<1x128xf32>
    %77 = vector.broadcast %76 : vector<1x128xf32> to vector<256x128xf32>
    %78 = arith.addf %75, %77 : vector<256x128xf32>
    %c0_46 = arith.constant 0 : index
    %c0_47 = arith.constant 0 : index
    %79 = vector.load %arg8[%c0_46, %c0_47] : memref<64x128xbf16, #tpu.memory_space<vmem>>, vector<64x128xbf16>
    %cst_48 = arith.constant dense<0.000000e+00> : vector<256x128xf32>
    %80 = tpu.matmul %2, %79, %cst_48 {dimension_numbers = #tpu.dot_dimension_numbers<[1], [0], [0], [1], [0, 0, 1, 1], [], []>} : vector<256x64xbf16>, vector<64x128xbf16>, vector<256x128xf32> -> vector<256x128xf32>
    %81 = arith.addf %78, %80 : vector<256x128xf32>
    %cst_49 = arith.constant 0.000000e+00 : f32
    %82 = vector.broadcast %cst_49 : f32 to vector<256x128xf32>
    %83 = arith.maximumf %81, %82 : vector<256x128xf32>
    %84 = vector.shape_cast %83 : vector<256x128xf32> to vector<1x256x128xf32>
    %85 = arith.truncf %84 : vector<1x256x128xf32> to vector<1x256x128xbf16>
    %c0_50 = arith.constant 0 : index
    %c0_51 = arith.constant 0 : index
    %c0_52 = arith.constant 0 : index
    %86 = vector.load %arg9[%c0_50, %c0_51, %c0_52] : memref<1x256x128xbf16, #tpu.memory_space<vmem>>, vector<1x256x128xbf16>
    tpu.vector_store %arg9[%c0_50, %c0_51, %c0_52], %85 {strides = array<i32>} : memref<1x256x128xbf16, #tpu.memory_space<vmem>>, vector<1x256x128xbf16>,
    return
  }
  func.func @transform_0(%arg0: i32) -> (i32, i32, i32) {
    %c0_i32 = arith.constant 0 : i32
    %c0_i32_0 = arith.constant 0 : i32
    %c0_i32_1 = arith.constant 0 : i32
    return %arg0, %c0_i32, %c0_i32_0 : i32, i32, i32
  }
  func.func @transform_1(%arg0: i32) -> (i32, i32) {
    %c0_i32 = arith.constant 0 : i32
    %c0_i32_0 = arith.constant 0 : i32
    %c0_i32_1 = arith.constant 0 : i32
    return %c0_i32, %c0_i32_0 : i32, i32
  }
  func.func @transform_2(%arg0: i32) -> (i32, i32) {
    %c0_i32 = arith.constant 0 : i32
    %c0_i32_0 = arith.constant 0 : i32
    %c0_i32_1 = arith.constant 0 : i32
    return %c0_i32, %c0_i32_0 : i32, i32
  }
  func.func @transform_3(%arg0: i32) -> (i32, i32, i32) {
    %c0_i32 = arith.constant 0 : i32
    %c0_i32_0 = arith.constant 0 : i32
    %c0_i32_1 = arith.constant 0 : i32
    %c0_i32_2 = arith.constant 0 : i32
    return %c0_i32, %c0_i32_0, %c0_i32_1 : i32, i32, i32
  }
  func.func @transform_4(%arg0: i32) -> (i32, i32) {
    %c0_i32 = arith.constant 0 : i32
    %c0_i32_0 = arith.constant 0 : i32
    %c0_i32_1 = arith.constant 0 : i32
    return %c0_i32, %c0_i32_0 : i32, i32
  }
  func.func @transform_5(%arg0: i32) -> (i32, i32) {
    %c0_i32 = arith.constant 0 : i32
    %c0_i32_0 = arith.constant 0 : i32
    %c0_i32_1 = arith.constant 0 : i32
    return %c0_i32, %c0_i32_0 : i32, i32
  }
  func.func @transform_6(%arg0: i32) -> (i32, i32) {
    %c0_i32 = arith.constant 0 : i32
    %c0_i32_0 = arith.constant 0 : i32
    %c0_i32_1 = arith.constant 0 : i32
    return %c0_i32, %c0_i32_0 : i32, i32
  }
  func.func @transform_7(%arg0: i32) -> (i32, i32) {
    %c0_i32 = arith.constant 0 : i32
    %c0_i32_0 = arith.constant 0 : i32
    %c0_i32_1 = arith.constant 0 : i32
    return %c0_i32, %c0_i32_0 : i32, i32
  }
  func.func @transform_8(%arg0: i32) -> (i32, i32, i32) {
    %c0_i32 = arith.constant 0 : i32
    %c0_i32_0 = arith.constant 0 : i32
    %c0_i32_1 = arith.constant 0 : i32
    return %arg0, %c0_i32, %c0_i32_0 : i32, i32, i32
  }
}

</mosaic_0001>

<llo_original>
// kernel: tpu_custom_call.1
$region0: #{tpu_custom_call.1}
  #allocation0 [shape = 'u32[]', space=smem, size = 0x4, offset = 0x4, fixed_abs, tag = 'smem constant byte address 0x4 - core index']
  #allocation1 [shape = 'u32[72,128]{1,0:T(1,128)}', space=vmem, size = 0x9000, scoped, tag = 'internal scratch']
  %s0 = inlined_call_operand.vmem [shape: f32[2,256,64], index: 0, kind: input, shape index: {}]
  %s1 = inlined_call_operand.vmem [shape: bf16[64,32], index: 1, kind: input, shape index: {}]
  %s2 = inlined_call_operand.vmem [shape: f32[1,32], index: 2, kind: input, shape index: {}]
  %s3 = inlined_call_operand.vmem [shape: bf16[9,32,32], index: 3, kind: input, shape index: {}]
  %s4 = inlined_call_operand.vmem [shape: f32[1,32], index: 4, kind: input, shape index: {}]
  %s5 = inlined_call_operand.vmem [shape: bf16[32,128], index: 5, kind: input, shape index: {}]
  %s6 = inlined_call_operand.vmem [shape: f32[1,128], index: 6, kind: input, shape index: {}]
  %s7 = inlined_call_operand.vmem [shape: bf16[64,128], index: 7, kind: input, shape index: {}]
  %s8 = inlined_call_operand.hbm [shape: bf16[2,256,128], index: 8, kind: output, shape index: {}]
  %s9 = sld [smem:[#allocation0]]
  $region65: #{tpu_custom_call.1} parent=0
    _
  %s11 = ssub.s32 1, %s9
  %s12 = scalar_select 0, %s11, %s9
  $region1: #{tpu_custom_call.1} parent=0
    #allocation2 [shape = 'u8[131072]{0}', space=vmem, size = 0x20000, scoped, tag = 'output window, operand 0']
    #allocation3 [shape = 's32[2]{0}', space=sflag, size = 0x8, scoped, tag = 'scoped memory for tpu_custom_call.1']
    %13 = vsyncpa [#allocation3], 0
    %s14 = scalar_lea.sflag [#allocation3], 1
    %15 = vsyncpa %s14, 0
    loop: start=0, step=1, limit=4
    $region2: #{tpu_custom_call.1} parent=1 // loop_pre_header
      _
    $region3: #{tpu_custom_call.1} parent=1 // loop_header
      %s17 = sphi 0, %s21
      %p18 = scmp.ge.s32.totalorder %s17, 4
      %s27 = sphi 0, %s29
      %s30 = sphi 0, %s27
      %s31 = sphi 0, %s30
      %s47 = sphi 0, %s31
      %s51 = sphi 0, %s51
      %s53 = sphi 0, %s51
      %s54 = sphi 0, %s53
      %s68 = sphi 0, %s54
      %s72 = sphi 0, %s72
      %s74 = sphi 0, %s72
      %s75 = sphi 0, %s74
      %s89 = sphi 0, %s75
      %s93 = sphi 0, %s93
      %s95 = sphi 0, %s93
      %s96 = sphi 0, %s95
      %s110 = sphi 0, %s96
      %s114 = sphi 0, %s114
      %s116 = sphi 0, %s114
      %s117 = sphi 0, %s116
      %s131 = sphi 0, %s117
      %s135 = sphi 0, %s135
      %s137 = sphi 0, %s135
      %s138 = sphi 0, %s137
      %s152 = sphi 0, %s138
      %s156 = sphi 0, %s156
      %s158 = sphi 0, %s156
      %s159 = sphi 0, %s158
      %s173 = sphi 0, %s159
      %s177 = sphi 0, %s177
      %s179 = sphi 0, %s177
      %s180 = sphi 0, %s179
      %s194 = sphi 0, %s180
      %s200 = sphi 0, %s202
      %s203 = sphi 0, %s200
      %s204 = sphi 0, %s203
      %s220 = sphi 0, %s204
    $region4: #{tpu_custom_call.1} parent=1 // loop_header_branch
      %20 = sbr.rel (%p18) target = $region8
    $region5: #{tpu_custom_call.1} parent=1 // loop_body
      %s22 = ssub.s32 %s17, 1
      %s23 = ssub.s32 %s17, 2
      %s24 = sadd.s32 %s17, 1
      %s25 = ssub.s32 %s17, %s24
      %p26 = scmp.eq.s32.totalorder %s25, 0
      %s28 = sadd.s32 %s27, 1
      %s29 = scalar_select %p26, %s27, %s28
      %p32 = pneg %p26
      %p33 = scmp.eq.s32.totalorder %s17, 1
      %p34 = por %p32, %p33
      %p35 = scmp.ne.s32.totalorder %s27, %s30
      %p36 = scmp.eq.s32.totalorder %s17, 0
      %p37 = por %p35, %p36
      %p38 = scmp.ne.s32.totalorder %s27, %s30
      %p39 = scmp.eq.s32.totalorder %s22, 1
      %p40 = por %p38, %p39
      %p41 = scmp.ne.s32.totalorder %s30, %s31
      %p42 = scmp.eq.s32.totalorder %s22, 0
      %p43 = por %p41, %p42
      %p44 = scmp.ne.s32.totalorder %s30, %s31
      %p45 = scmp.eq.s32.totalorder %s23, 1
      %p46 = por %p44, %p45
      %p48 = scmp.ne.s32.totalorder %s31, %s47
      %p49 = scmp.eq.s32.totalorder %s23, 0
      %p50 = por %p48, %p49
      %s52 = sadd.s32 %s51, 1
      %p55 = scmp.eq.s32.totalorder %s17, 1
      %p56 = scmp.ne.s32.totalorder %s51, %s53
      %p57 = scmp.eq.s32.totalorder %s17, 0
      %p58 = por %p56, %p57
      %p59 = scmp.ne.s32.totalorder %s51, %s53
      %p60 = scmp.eq.s32.totalorder %s22, 1
      %p61 = por %p59, %p60
      %p62 = scmp.ne.s32.totalorder %s53, %s54
      %p63 = scmp.eq.s32.totalorder %s22, 0
      %p64 = por %p62, %p63
      %p65 = scmp.ne.s32.totalorder %s53, %s54
      %p66 = scmp.eq.s32.totalorder %s23, 1
      %p67 = por %p65, %p66
      %p69 = scmp.ne.s32.totalorder %s54, %s68
      %p70 = scmp.eq.s32.totalorder %s23, 0
      %p71 = por %p69, %p70
      %s73 = sadd.s32 %s72, 1
      %p76 = scmp.eq.s32.totalorder %s17, 1
      %p77 = scmp.ne.s32.totalorder %s72, %s74
      %p78 = scmp.eq.s32.totalorder %s17, 0
      %p79 = por %p77, %p78
      %p80 = scmp.ne.s32.totalorder %s72, %s74
      %p81 = scmp.eq.s32.totalorder %s22, 1
      %p82 = por %p80, %p81
      %p83 = scmp.ne.s32.totalorder %s74, %s75
      %p84 = scmp.eq.s32.totalorder %s22, 0
      %p85 = por %p83, %p84
      %p86 = scmp.ne.s32.totalorder %s74, %s75
      %p87 = scmp.eq.s32.totalorder %s23, 1
      %p88 = por %p86, %p87
      %p90 = scmp.ne.s32.totalorder %s75, %s89
      %p91 = scmp.eq.s32.totalorder %s23, 0
      %p92 = por %p90, %p91
      %s94 = sadd.s32 %s93, 1
      %p97 = scmp.eq.s32.totalorder %s17, 1
      %p98 = scmp.ne.s32.totalorder %s93, %s95
      %p99 = scmp.eq.s32.totalorder %s17, 0
      %p100 = por %p98, %p99
      %p101 = scmp.ne.s32.totalorder %s93, %s95
      %p102 = scmp.eq.s32.totalorder %s22, 1
      %p103 = por %p101, %p102
      %p104 = scmp.ne.s32.totalorder %s95, %s96
      %p105 = scmp.eq.s32.totalorder %s22, 0
      %p106 = por %p104, %p105
      %p107 = scmp.ne.s32.totalorder %s95, %s96
      %p108 = scmp.eq.s32.totalorder %s23, 1
      %p109 = por %p107, %p108
      %p111 = scmp.ne.s32.totalorder %s96, %s110
      %p112 = scmp.eq.s32.totalorder %s23, 0
      %p113 = por %p111, %p112
      %s115 = sadd.s32 %s114, 1
      %p118 = scmp.eq.s32.totalorder %s17, 1
      %p119 = scmp.ne.s32.totalorder %s114, %s116
      %p120 = scmp.eq.s32.totalorder %s17, 0
      %p121 = por %p119, %p120
      %p122 = scmp.ne.s32.totalorder %s114, %s116
      %p123 = scmp.eq.s32.totalorder %s22, 1
      %p124 = por %p122, %p123
      %p125 = scmp.ne.s32.totalorder %s116, %s117
      %p126 = scmp.eq.s32.totalorder %s22, 0
      %p127 = por %p125, %p126
      %p128 = scmp.ne.s32.totalorder %s116, %s117
      %p129 = scmp.eq.s32.totalorder %s23, 1
      %p130 = por %p128, %p129
      %p132 = scmp.ne.s32.totalorder %s117, %s131
      %p133 = scmp.eq.s32.totalorder %s23, 0
      %p134 = por %p132, %p133
      %s136 = sadd.s32 %s135, 1
      %p139 = scmp.eq.s32.totalorder %s17, 1
      %p140 = scmp.ne.s32.totalorder %s135, %s137
      %p141 = scmp.eq.s32.totalorder %s17, 0
      %p142 = por %p140, %p141
      %p143 = scmp.ne.s32.totalorder %s135, %s137
      %p144 = scmp.eq.s32.totalorder %s22, 1
      %p145 = por %p143, %p144
      %p146 = scmp.ne.s32.totalorder %s137, %s138
      %p147 = scmp.eq.s32.totalorder %s22, 0
      %p148 = por %p146, %p147
      %p149 = scmp.ne.s32.totalorder %s137, %s138
      %p150 = scmp.eq.s32.totalorder %s23, 1
      %p151 = por %p149, %p150
      %p153 = scmp.ne.s32.totalorder %s138, %s152
      %p154 = scmp.eq.s32.totalorder %s23, 0
      %p155 = por %p153, %p154
      %s157 = sadd.s32 %s156, 1
      %p160 = scmp.eq.s32.totalorder %s17, 1
      %p161 = scmp.ne.s32.totalorder %s156, %s158
      %p162 = scmp.eq.s32.totalorder %s17, 0
      %p163 = por %p161, %p162
      %p164 = scmp.ne.s32.totalorder %s156, %s158
      %p165 = scmp.eq.s32.totalorder %s22, 1
      %p166 = por %p164, %p165
      %p167 = scmp.ne.s32.totalorder %s158, %s159
      %p168 = scmp.eq.s32.totalorder %s22, 0
      %p169 = por %p167, %p168
      %p170 = scmp.ne.s32.totalorder %s158, %s159
      %p171 = scmp.eq.s32.totalorder %s23, 1
      %p172 = por %p170, %p171
      %p174 = scmp.ne.s32.totalorder %s159, %s173
      %p175 = scmp.eq.s32.totalorder %s23, 0
      %p176 = por %p174, %p175
      %s178 = sadd.s32 %s177, 1
      %p181 = scmp.eq.s32.totalorder %s17, 1
      %p182 = scmp.ne.s32.totalorder %s177, %s179
      %p183 = scmp.eq.s32.totalorder %s17, 0
      %p184 = por %p182, %p183
      %p185 = scmp.ne.s32.totalorder %s177, %s179
      %p186 = scmp.eq.s32.totalorder %s22, 1
      %p187 = por %p185, %p186
      %p188 = scmp.ne.s32.totalorder %s179, %s180
      %p189 = scmp.eq.s32.totalorder %s22, 0
      %p190 = por %p188, %p189
      %p191 = scmp.ne.s32.totalorder %s179, %s180
      %p192 = scmp.eq.s32.totalorder %s23, 1
      %p193 = por %p191, %p192
      %p195 = scmp.ne.s32.totalorder %s180, %s194
      %p196 = scmp.eq.s32.totalorder %s23, 0
      %p197 = por %p195, %p196
      %s198 = ssub.s32 %s17, %s24
      %p199 = scmp.eq.s32.totalorder %s198, 0
      %s201 = sadd.s32 %s200, 1
      %s202 = scalar_select %p199, %s200, %s201
      %p205 = pneg %p199
      %p206 = scmp.eq.s32.totalorder %s17, 1
      %p207 = por %p205, %p206
      %p208 = scmp.ne.s32.totalorder %s200, %s203
      %p209 = scmp.eq.s32.totalorder %s17, 0
      %p210 = por %p208, %p209
      %p211 = scmp.ne.s32.totalorder %s200, %s203
      %p212 = scmp.eq.s32.totalorder %s22, 1
      %p213 = por %p211, %p212
      %p214 = scmp.ne.s32.totalorder %s203, %s204
      %p215 = scmp.eq.s32.totalorder %s22, 0
      %p216 = por %p214, %p215
      %p217 = scmp.ne.s32.totalorder %s203, %s204
      %p218 = scmp.eq.s32.totalorder %s23, 1
      %p219 = por %p217, %p218
      %p221 = scmp.ne.s32.totalorder %s204, %s220
      %p222 = scmp.eq.s32.totalorder %s23, 0
      %p223 = por %p221, %p222
      %p224 = scmp.le.s32.totalorder 1, %s17
      %p225 = scmp.lt.s32.totalorder %s17, 3
      %p226 = pnand %p224, %p225
      %p227 = pneg %p226
      // Predicated region
      $region9: #{tpu_custom_call.1} parent=5 // pred_check
        _
      $region10: #{tpu_custom_call.1} parent=5 // pred_check_branch
        %229 = sbr.rel (%p226) target = $region12
      $region11: #{tpu_custom_call.1} parent=5 // pred_region
        %s230 = ssub.s32 %s17, 1
        // Predicated region
        $region13: #{tpu_custom_call.1} parent=11 // pred_check
          %p231 = pneg %p64
        $region14: #{tpu_custom_call.1} parent=11 // pred_check_branch
          %233 = sbr.rel (%p231) target = $region16
        $region15: #{tpu_custom_call.1} parent=11 // pred_region
          _
        $region16: #{tpu_custom_call.1} parent=11 // pred_fallthru
          _
        // Predicated region
        $region17: #{tpu_custom_call.1} parent=11 // pred_check
          %p234 = pneg %p85
        $region18: #{tpu_custom_call.1} parent=11 // pred_check_branch
          %236 = sbr.rel (%p234) target = $region20
        $region19: #{tpu_custom_call.1} parent=11 // pred_region
          _
        $region20: #{tpu_custom_call.1} parent=11 // pred_fallthru
          _
        // Predicated region
        $region21: #{tpu_custom_call.1} parent=11 // pred_check
          %p237 = pneg %p106
        $region22: #{tpu_custom_call.1} parent=11 // pred_check_branch
          %239 = sbr.rel (%p237) target = $region24
        $region23: #{tpu_custom_call.1} parent=11 // pred_region
          _
        $region24: #{tpu_custom_call.1} parent=11 // pred_fallthru
          _
        // Predicated region
        $region25: #{tpu_custom_call.1} parent=11 // pred_check
          %p240 = pneg %p127
        $region26: #{tpu_custom_call.1} parent=11 // pred_check_branch
          %242 = sbr.rel (%p240) target = $region28
        $region27: #{tpu_custom_call.1} parent=11 // pred_region
          _
        $region28: #{tpu_custom_call.1} parent=11 // pred_fallthru
          _
        // Predicated region
        $region29: #{tpu_custom_call.1} parent=11 // pred_check
          %p243 = pneg %p148
        $region30: #{tpu_custom_call.1} parent=11 // pred_check_branch
          %245 = sbr.rel (%p243) target = $region32
        $region31: #{tpu_custom_call.1} parent=11 // pred_region
          _
        $region32: #{tpu_custom_call.1} parent=11 // pred_fallthru
          _
        // Predicated region
        $region33: #{tpu_custom_call.1} parent=11 // pred_check
          %p246 = pneg %p169
        $region34: #{tpu_custom_call.1} parent=11 // pred_check_branch
          %248 = sbr.rel (%p246) target = $region36
        $region35: #{tpu_custom_call.1} parent=11 // pred_region
          _
        $region36: #{tpu_custom_call.1} parent=11 // pred_fallthru
          _
        // Predicated region
        $region37: #{tpu_custom_call.1} parent=11 // pred_check
          %p249 = pneg %p190
        $region38: #{tpu_custom_call.1} parent=11 // pred_check_branch
          %251 = sbr.rel (%p249) target = $region40
        $region39: #{tpu_custom_call.1} parent=11 // pred_region
          _
        $region40: #{tpu_custom_call.1} parent=11 // pred_fallthru
          _
      $region12: #{tpu_custom_call.1} parent=5 // pred_fallthru
        _
      %p252 = scmp.lt.s32.totalorder %s17, 2
      // Predicated region
      $region41: #{tpu_custom_call.1} parent=5 // pred_check
        %p253 = pneg %p252
      $region42: #{tpu_custom_call.1} parent=5 // pred_check_branch
        %255 = sbr.rel (%p253) target = $region44
      $region43: #{tpu_custom_call.1} parent=5 // pred_region
        // Predicated region
        $region45: #{tpu_custom_call.1} parent=43 // pred_check
          %p256 = pneg %p37
        $region46: #{tpu_custom_call.1} parent=43 // pred_check_branch
          %258 = sbr.rel (%p256) target = $region48
        $region47: #{tpu_custom_call.1} parent=43 // pred_region
          %p259 = scmp.lt.s32.totalorder %s17, 1
          %s260 = scalar_select %p259, %s17, 1
          %s261 = smul.addr %s260, 32
          %s262 = smul.addr %s261, 8
          %s263 = scalar_lea.vmem %s0, %s262
        $region48: #{tpu_custom_call.1} parent=43 // pred_fallthru
          _
      $region44: #{tpu_custom_call.1} parent=5 // pred_fallthru
        _
      %p264 = scmp.le.s32.totalorder 1, %s17
      %p265 = scmp.lt.s32.totalorder %s17, 3
      %p266 = pnand %p264, %p265
      %p267 = pneg %p266
      // Predicated region
      $region49: #{tpu_custom_call.1} parent=5 // pred_check
        _
      $region50: #{tpu_custom_call.1} parent=5 // pred_check_branch
        %269 = sbr.rel (%p266) target = $region52
      $region51: #{tpu_custom_call.1} parent=5 // pred_region
        %s270 = ssub.s32 %s17, 1
        %p271 = scmp.lt.s32.totalorder %s22, 1
        %s272 = scalar_select %p271, %s22, 1
        %s273 = smul.addr %s272, 32
        %s274 = smul.addr %s273, 8
        %s275 = scalar_lea.vmem %s0, %s274
        %p276 = pneg %p43
        %p277 = pneg %p40
        %p278 = pneg %p64
        %p279 = pneg %p61
        %p280 = pneg %p85
        %p281 = pneg %p82
        %p282 = pneg %p106
        %p283 = pneg %p103
        %p284 = pneg %p127
        %p285 = pneg %p124
        %p286 = pneg %p148
        %p287 = pneg %p145
        %p288 = pneg %p169
        %p289 = pneg %p166
        %p290 = pneg %p190
        %p291 = pneg %p187
        %p292 = pneg %p216
        %p293 = pneg %p213
        %s294 = sand.u32 %s203, 1
        %s295 = scalar_lea.sflag [#allocation3], %s294
        %s296 = sand.u32 %s203, 1
        %s297 = smul.addr %s296, 128
        %s298 = scalar_lea.vmem [#allocation2], %s297
        %p299 = scmp.lt.s32.totalorder %s22, 1
        %s300 = scalar_select %p299, %s22, 1
        %s301 = smul.addr %s300, 32
        %s302 = smul.addr %s301, 8
        %s303 = scalar_lea.vmem %s0, %s302
        %v305 = vld [vmem:[%s303] sm:$0xff]
        %v306 = vld [vmem:[%s303 + $0x8] sm:$0xff]
        %v307 = vld [vmem:[%s303 + $0x10] sm:$0xff]
        %v308 = vld [vmem:[%s303 + $0x18] sm:$0xff]
        %v309 = vld [vmem:[%s303 + $0x20] sm:$0xff]
        %v310 = vld [vmem:[%s303 + $0x28] sm:$0xff]
        %v311 = vld [vmem:[%s303 + $0x30] sm:$0xff]
        %v312 = vld [vmem:[%s303 + $0x38] sm:$0xff]
        %v313 = vld [vmem:[%s303 + $0x40] sm:$0xff]
        %v314 = vld [vmem:[%s303 + $0x48] sm:$0xff]
        %v315 = vld [vmem:[%s303 + $0x50] sm:$0xff]
        %v316 = vld [vmem:[%s303 + $0x58] sm:$0xff]
        %v317 = vld [vmem:[%s303 + $0x60] sm:$0xff]
        %v318 = vld [vmem:[%s303 + $0x68] sm:$0xff]
        %v319 = vld [vmem:[%s303 + $0x70] sm:$0xff]
        %v320 = vld [vmem:[%s303 + $0x78] sm:$0xff]
        %v321 = vld [vmem:[%s303 + $0x80] sm:$0xff]
        %v322 = vld [vmem:[%s303 + $0x88] sm:$0xff]
        %v323 = vld [vmem:[%s303 + $0x90] sm:$0xff]
        %v324 = vld [vmem:[%s303 + $0x98] sm:$0xff]
        %v325 = vld [vmem:[%s303 + $0xa0] sm:$0xff]
        %v326 = vld [vmem:[%s303 + $0xa8] sm:$0xff]
        %v327 = vld [vmem:[%s303 + $0xb0] sm:$0xff]
        %v328 = vld [vmem:[%s303 + $0xb8] sm:$0xff]
        %v329 = vld [vmem:[%s303 + $0xc0] sm:$0xff]
        %v330 = vld [vmem:[%s303 + $0xc8] sm:$0xff]
        %v331 = vld [vmem:[%s303 + $0xd0] sm:$0xff]
        %v332 = vld [vmem:[%s303 + $0xd8] sm:$0xff]
        %v333 = vld [vmem:[%s303 + $0xe0] sm:$0xff]
        %v334 = vld [vmem:[%s303 + $0xe8] sm:$0xff]
        %v335 = vld [vmem:[%s303 + $0xf0] sm:$0xff]
        %v336 = vld [vmem:[%s303 + $0xf8] sm:$0xff]
        %v337 = vpack.c.bf16 %v306, %v305
        %v338 = vpack.c.bf16 %v308, %v307
        %v339 = vpack.c.bf16 %v310, %v309
        %v340 = vpack.c.bf16 %v312, %v311
        %v341 = vpack.c.bf16 %v314, %v313
        %v342 = vpack.c.bf16 %v316, %v315
        %v343 = vpack.c.bf16 %v318, %v317
        %v344 = vpack.c.bf16 %v320, %v319
        %v345 = vpack.c.bf16 %v322, %v321
        %v346 = vpack.c.bf16 %v324, %v323
        %v347 = vpack.c.bf16 %v326, %v325
        %v348 = vpack.c.bf16 %v328, %v327
        %v349 = vpack.c.bf16 %v330, %v329
        %v350 = vpack.c.bf16 %v332, %v331
        %v351 = vpack.c.bf16 %v334, %v333
        %v352 = vpack.c.bf16 %v336, %v335
        %v353 = vld [vmem:[%s1] sm:$0xf]
        %v354 = vld [vmem:[%s1 + $0x4] sm:$0xf]
        %v355 = vld [vmem:[%s1 + $0x8] sm:$0xf]
        %v356 = vld [vmem:[%s1 + $0xc] sm:$0xf]
        %v357 = vld [vmem:[%s1 + $0x10] sm:$0xf]
        %v358 = vld [vmem:[%s1 + $0x14] sm:$0xf]
        %v359 = vld [vmem:[%s1 + $0x18] sm:$0xf]
        %v360 = vld [vmem:[%s1 + $0x1c] sm:$0xf]
        %v361 = vld [vmem:[%s2] sm:$0x1]
        %v363 = vperm.slane %v361, 0
        %v373 = vunpack.c.l.b16 %v353
        %v374 = vunpack.c.l.b16 %v354
        %v375 = vunpack.c.l.b16 %v355
        %v376 = vunpack.c.l.b16 %v356
        %v377 = vunpack.c.l.b16 %v357
        %v378 = vunpack.c.l.b16 %v358
        %v379 = vunpack.c.l.b16 %v359
        %v380 = vunpack.c.l.b16 %v360
        %v381 = vpack.c.b16 %v374, %v373
        %v382 = vpack.c.b16 %v376, %v375
        %v383 = vpack.c.b16 %v378, %v377
        %v384 = vpack.c.b16 %v380, %v379
        %vm389 = vcmask 523264
        %v391 = vsel %vm389, %v337, 0
        %v394 = vsel %vm389, %v338, 0
        %v397 = vsel %vm389, %v339, 0
        %v400 = vsel %vm389, %v340, 0
        %v403 = vsel %vm389, %v341, 0
        %v406 = vsel %vm389, %v342, 0
        %v409 = vsel %vm389, %v343, 0
        %v412 = vsel %vm389, %v344, 0
        %v415 = vsel %vm389, %v345, 0
        %v418 = vsel %vm389, %v346, 0
        %v421 = vsel %vm389, %v347, 0
        %v424 = vsel %vm389, %v348, 0
        %v427 = vsel %vm389, %v349, 0
        %v430 = vsel %vm389, %v350, 0
        %v433 = vsel %vm389, %v351, 0
        %v436 = vsel %vm389, %v352, 0
        %438 = vmatpush.bf16.msra.mxu0 0
        %439 = vmatpush.bf16.msra.mxu0 0
        %440 = vmatpush.bf16.msra.mxu0 0
        %441 = vmatpush.bf16.msra.mxu0 0
        %442 = vmatpush.bf16.msra.mxu0 %v384
        %443 = vmatpush.bf16.msra.mxu0 %v383
        %444 = vmatpush.bf16.msra.mxu0 %v382
        %445 = vmatpush.bf16.msra.mxu0 %v381
        %446 = vmatmul.bf16.gmra.mxu0 %v391
        %v447 = vpop.f32.mrf.mxu0
        %v448 = vadd.f32 %v363, %v447
        %v449 = vpop.f32.mrf.mxu0
        %v450 = vadd.f32 %v363, %v449
        %451 = vmatmul.bf16.gmra.mxu0 %v394
        %v452 = vpop.f32.mrf.mxu0
        %v453 = vadd.f32 %v363, %v452
        %v454 = vpop.f32.mrf.mxu0
        %v455 = vadd.f32 %v363, %v454
        %456 = vmatmul.bf16.gmra.mxu0 %v397
        %v457 = vpop.f32.mrf.mxu0
        %v458 = vadd.f32 %v363, %v457
        %v459 = vpop.f32.mrf.mxu0
        %v460 = vadd.f32 %v363, %v459
        %461 = vmatmul.bf16.gmra.mxu0 %v400
        %v462 = vpop.f32.mrf.mxu0
        %v463 = vadd.f32 %v363, %v462
        %v464 = vpop.f32.mrf.mxu0
        %v465 = vadd.f32 %v363, %v464
        %466 = vmatmul.bf16.gmra.mxu0 %v403
        %v467 = vpop.f32.mrf.mxu0
        %v468 = vadd.f32 %v363, %v467
        %v469 = vpop.f32.mrf.mxu0
        %v470 = vadd.f32 %v363, %v469
        %471 = vmatmul.bf16.gmra.mxu0 %v406
        %v472 = vpop.f32.mrf.mxu0
        %v473 = vadd.f32 %v363, %v472
        %v474 = vpop.f32.mrf.mxu0
        %v475 = vadd.f32 %v363, %v474
        %476 = vmatmul.bf16.gmra.mxu0 %v409
        %v477 = vpop.f32.mrf.mxu0
        %v478 = vadd.f32 %v363, %v477
        %v479 = vpop.f32.mrf.mxu0
        %v480 = vadd.f32 %v363, %v479
        %481 = vmatmul.bf16.gmra.mxu0 %v412
        %v482 = vpop.f32.mrf.mxu0
        %v483 = vadd.f32 %v363, %v482
        %v484 = vpop.f32.mrf.mxu0
        %v485 = vadd.f32 %v363, %v484
        %486 = vmatmul.bf16.gmra.mxu0 %v415
        %v487 = vpop.f32.mrf.mxu0
        %v488 = vadd.f32 %v363, %v487
        %v489 = vpop.f32.mrf.mxu0
        %v490 = vadd.f32 %v363, %v489
        %491 = vmatmul.bf16.gmra.mxu0 %v418
        %v492 = vpop.f32.mrf.mxu0
        %v493 = vadd.f32 %v363, %v492
        %v494 = vpop.f32.mrf.mxu0
        %v495 = vadd.f32 %v363, %v494
        %496 = vmatmul.bf16.gmra.mxu0 %v421
        %v497 = vpop.f32.mrf.mxu0
        %v498 = vadd.f32 %v363, %v497
        %v499 = vpop.f32.mrf.mxu0
        %v500 = vadd.f32 %v363, %v499
        %501 = vmatmul.bf16.gmra.mxu0 %v424
        %v502 = vpop.f32.mrf.mxu0
        %v503 = vadd.f32 %v363, %v502
        %v504 = vpop.f32.mrf.mxu0
        %v505 = vadd.f32 %v363, %v504
        %506 = vmatmul.bf16.gmra.mxu0 %v427
        %v507 = vpop.f32.mrf.mxu0
        %v508 = vadd.f32 %v363, %v507
        %v509 = vpop.f32.mrf.mxu0
        %v510 = vadd.f32 %v363, %v509
        %511 = vmatmul.bf16.gmra.mxu0 %v430
        %v512 = vpop.f32.mrf.mxu0
        %v513 = vadd.f32 %v363, %v512
        %v514 = vpop.f32.mrf.mxu0
        %v515 = vadd.f32 %v363, %v514
        %516 = vmatmul.bf16.gmra.mxu0 %v433
        %v517 = vpop.f32.mrf.mxu0
        %v518 = vadd.f32 %v363, %v517
        %v519 = vpop.f32.mrf.mxu0
        %v520 = vadd.f32 %v363, %v519
        %521 = vmatmul.bf16.gmra.mxu0 %v436
        %v522 = vpop.f32.mrf.mxu0
        %v523 = vadd.f32 %v363, %v522
        %v524 = vpop.f32.mrf.mxu0
        %v525 = vadd.f32 %v363, %v524
        %526 = vdwg.mxu0
        %v527 = vmax.f32 %v448, 0.0
        %v528 = vmax.f32 %v450, 0.0
        %v529 = vmax.f32 %v453, 0.0
        %v530 = vmax.f32 %v455, 0.0
        %v531 = vmax.f32 %v458, 0.0
        %v532 = vmax.f32 %v460, 0.0
        %v533 = vmax.f32 %v463, 0.0
        %v534 = vmax.f32 %v465, 0.0
        %v535 = vmax.f32 %v468, 0.0
        %v536 = vmax.f32 %v470, 0.0
        %v537 = vmax.f32 %v473, 0.0
        %v538 = vmax.f32 %v475, 0.0
        %v539 = vmax.f32 %v478, 0.0
        %v540 = vmax.f32 %v480, 0.0
        %v541 = vmax.f32 %v483, 0.0
        %v542 = vmax.f32 %v485, 0.0
        %v543 = vmax.f32 %v488, 0.0
        %v544 = vmax.f32 %v490, 0.0
        %v545 = vmax.f32 %v493, 0.0
        %v546 = vmax.f32 %v495, 0.0
        %v547 = vmax.f32 %v498, 0.0
        %v548 = vmax.f32 %v500, 0.0
        %v549 = vmax.f32 %v503, 0.0
        %v550 = vmax.f32 %v505, 0.0
        %v551 = vmax.f32 %v508, 0.0
        %v552 = vmax.f32 %v510, 0.0
        %v553 = vmax.f32 %v513, 0.0
        %v554 = vmax.f32 %v515, 0.0
        %v555 = vmax.f32 %v518, 0.0
        %v556 = vmax.f32 %v520, 0.0
        %v557 = vmax.f32 %v523, 0.0
        %v558 = vmax.f32 %v525, 0.0
        %v559 = vpack.c.bf16 %v527, %v527
        %v560 = vpack.c.bf16 %v528, %v528
        %v561 = vpack.c.bf16 %v529, %v529
        %v562 = vpack.c.bf16 %v530, %v530
        %v563 = vpack.c.bf16 %v531, %v531
        %v564 = vpack.c.bf16 %v532, %v532
        %v565 = vpack.c.bf16 %v533, %v533
        %v566 = vpack.c.bf16 %v534, %v534
        %v567 = vpack.c.bf16 %v535, %v535
        %v568 = vpack.c.bf16 %v536, %v536
        %v569 = vpack.c.bf16 %v537, %v537
        %v570 = vpack.c.bf16 %v538, %v538
        %v571 = vpack.c.bf16 %v539, %v539
        %v572 = vpack.c.bf16 %v540, %v540
        %v573 = vpack.c.bf16 %v541, %v541
        %v574 = vpack.c.bf16 %v542, %v542
        %v575 = vpack.c.bf16 %v543, %v543
        %v576 = vpack.c.bf16 %v544, %v544
        %v577 = vpack.c.bf16 %v545, %v545
        %v578 = vpack.c.bf16 %v546, %v546
        %v579 = vpack.c.bf16 %v547, %v547
        %v580 = vpack.c.bf16 %v548, %v548
        %v581 = vpack.c.bf16 %v549, %v549
        %v582 = vpack.c.bf16 %v550, %v550
        %v583 = vpack.c.bf16 %v551, %v551
        %v584 = vpack.c.bf16 %v552, %v552
        %v585 = vpack.c.bf16 %v553, %v553
        %v586 = vpack.c.bf16 %v554, %v554
        %v587 = vpack.c.bf16 %v555, %v555
        %v588 = vpack.c.bf16 %v556, %v556
        %v589 = vpack.c.bf16 %v557, %v557
        %v590 = vpack.c.bf16 %v558, %v558
        %v623 = vunpack.c.l.b16 %v559
        %v624 = vunpack.c.l.b16 %v560
        %v625 = vunpack.c.l.b16 %v561
        %v626 = vunpack.c.l.b16 %v562
        %v627 = vunpack.c.l.b16 %v563
        %v628 = vunpack.c.l.b16 %v564
        %v629 = vunpack.c.l.b16 %v565
        %v630 = vunpack.c.l.b16 %v566
        %v631 = vunpack.c.l.b16 %v567
        %v632 = vunpack.c.l.b16 %v568
        %v633 = vunpack.c.l.b16 %v569
        %v634 = vunpack.c.l.b16 %v570
        %v635 = vunpack.c.l.b16 %v571
        %v636 = vunpack.c.l.b16 %v572
        %v637 = vunpack.c.l.b16 %v573
        %v638 = vunpack.c.l.b16 %v574
        %v639 = vunpack.c.l.b16 %v575
        %v640 = vunpack.c.l.b16 %v576
        %v641 = vunpack.c.l.b16 %v577
        %v642 = vunpack.c.l.b16 %v578
        %v643 = vunpack.c.l.b16 %v579
        %v644 = vunpack.c.l.b16 %v580
        %v645 = vunpack.c.l.b16 %v581
        %v646 = vunpack.c.l.b16 %v582
        %v647 = vunpack.c.l.b16 %v583
        %v648 = vunpack.c.l.b16 %v584
        %v649 = vunpack.c.l.b16 %v585
        %v650 = vunpack.c.l.b16 %v586
        %v651 = vunpack.c.l.b16 %v587
        %v652 = vunpack.c.l.b16 %v588
        %v653 = vunpack.c.l.b16 %v589
        %v654 = vunpack.c.l.b16 %v590
        %v655 = vpack.c.b16 %v624, %v623
        %v656 = vpack.c.b16 %v626, %v625
        %v657 = vpack.c.b16 %v628, %v627
        %v658 = vpack.c.b16 %v630, %v629
        %v659 = vpack.c.b16 %v632, %v631
        %v660 = vpack.c.b16 %v634, %v633
        %v661 = vpack.c.b16 %v636, %v635
        %v662 = vpack.c.b16 %v638, %v637
        %v663 = vpack.c.b16 %v640, %v639
        %v664 = vpack.c.b16 %v642, %v641
        %v665 = vpack.c.b16 %v644, %v643
        %v666 = vpack.c.b16 %v646, %v645
        %v667 = vpack.c.b16 %v648, %v647
        %v668 = vpack.c.b16 %v650, %v649
        %v669 = vpack.c.b16 %v652, %v651
        %v670 = vpack.c.b16 %v654, %v653
        %v672 = vshrl.u32 %v655, 16
        %v674 = vrot.slane %v672, 7
        %v675 = vshll.u32 %v655, 16
        %v677 = vor.u32 %v674, %v675
        %v679 = vshrl.u32 %v656, 16
        %v681 = vrot.slane %v679, 7
        %v682 = vshll.u32 %v656, 16
        %v684 = vor.u32 %v681, %v682
        %v686 = vshrl.u32 %v657, 16
        %v688 = vrot.slane %v686, 7
        %v689 = vshll.u32 %v657, 16
        %v691 = vor.u32 %v688, %v689
        %v693 = vshrl.u32 %v658, 16
        %v695 = vrot.slane %v693, 7
        %v696 = vshll.u32 %v658, 16
        %v698 = vor.u32 %v695, %v696
        %v700 = vshrl.u32 %v659, 16
        %v702 = vrot.slane %v700, 7
        %v703 = vshll.u32 %v659, 16
        %v705 = vor.u32 %v702, %v703
        %v707 = vshrl.u32 %v660, 16
        %v709 = vrot.slane %v707, 7
        %v710 = vshll.u32 %v660, 16
        %v712 = vor.u32 %v709, %v710
        %v714 = vshrl.u32 %v661, 16
        %v716 = vrot.slane %v714, 7
        %v717 = vshll.u32 %v661, 16
        %v719 = vor.u32 %v716, %v717
        %v721 = vshrl.u32 %v662, 16
        %v723 = vrot.slane %v721, 7
        %v724 = vshll.u32 %v662, 16
        %v726 = vor.u32 %v723, %v724
        %v728 = vshrl.u32 %v663, 16
        %v730 = vrot.slane %v728, 7
        %v731 = vshll.u32 %v663, 16
        %v733 = vor.u32 %v730, %v731
        %v735 = vshrl.u32 %v664, 16
        %v737 = vrot.slane %v735, 7
        %v738 = vshll.u32 %v664, 16
        %v740 = vor.u32 %v737, %v738
        %v742 = vshrl.u32 %v665, 16
        %v744 = vrot.slane %v742, 7
        %v745 = vshll.u32 %v665, 16
        %v747 = vor.u32 %v744, %v745
        %v749 = vshrl.u32 %v666, 16
        %v751 = vrot.slane %v749, 7
        %v752 = vshll.u32 %v666, 16
        %v754 = vor.u32 %v751, %v752
        %v756 = vshrl.u32 %v667, 16
        %v758 = vrot.slane %v756, 7
        %v759 = vshll.u32 %v667, 16
        %v761 = vor.u32 %v758, %v759
        %v763 = vshrl.u32 %v668, 16
        %v765 = vrot.slane %v763, 7
        %v766 = vshll.u32 %v668, 16
        %v768 = vor.u32 %v765, %v766
        %v770 = vshrl.u32 %v669, 16
        %v772 = vrot.slane %v770, 7
        %v773 = vshll.u32 %v669, 16
        %v775 = vor.u32 %v772, %v773
        %v777 = vshrl.u32 %v670, 16
        %v779 = vrot.slane %v777, 7
        %v780 = vshll.u32 %v670, 16
        %v782 = vor.u32 %v779, %v780
        %vm815 = vcmask 1040384
        %vm816 = vsmask.f32 256
        %vm817 = vmand %vm815, %vm816
        %v818 = vsel %vm817, 0, %v677
        %v819 = vsel %vm817, 0, %v684
        %v820 = vsel %vm817, 0, %v691
        %v821 = vsel %vm817, 0, %v698
        %v822 = vsel %vm817, 0, %v705
        %v823 = vsel %vm817, 0, %v712
        %v824 = vsel %vm817, 0, %v719
        %v825 = vsel %vm817, 0, %v726
        %v826 = vsel %vm817, 0, %v733
        %v827 = vsel %vm817, 0, %v740
        %v828 = vsel %vm817, 0, %v747
        %v829 = vsel %vm817, 0, %v754
        %v830 = vsel %vm817, 0, %v761
        %v831 = vsel %vm817, 0, %v768
        %v832 = vsel %vm817, 0, %v775
        %v833 = vsel %vm817, 0, %v782
        %v834 = vsel %vm817, %v674, 0
        %v835 = vsel %vm817, %v681, 0
        %v836 = vsel %vm817, %v688, 0
        %v837 = vsel %vm817, %v695, 0
        %v838 = vsel %vm817, %v702, 0
        %v839 = vsel %vm817, %v709, 0
        %v840 = vsel %vm817, %v716, 0
        %v841 = vsel %vm817, %v723, 0
        %v842 = vsel %vm817, %v730, 0
        %v843 = vsel %vm817, %v737, 0
        %v844 = vsel %vm817, %v744, 0
        %v845 = vsel %vm817, %v751, 0
        %v846 = vsel %vm817, %v758, 0
        %v847 = vsel %vm817, %v765, 0
        %v848 = vsel %vm817, %v772, 0
        %v849 = vsel %vm817, %v779, 0
        %v850 = vld [vmem:[%s3] sm:$0xf]
        %v851 = vld [vmem:[%s3 + $0x4] sm:$0xf]
        %v852 = vld [vmem:[%s3 + $0x8] sm:$0xf]
        %v853 = vld [vmem:[%s3 + $0xc] sm:$0xf]
        %s854 = scalar_lea.vmem %s3, 48
        %v855 = vld [vmem:[%s854] sm:$0xf]
        %v856 = vld [vmem:[%s854 + $0x4] sm:$0xf]
        %v857 = vld [vmem:[%s854 + $0x8] sm:$0xf]
        %v858 = vld [vmem:[%s854 + $0xc] sm:$0xf]
        %v863 = vunpack.c.l.b16 %v855
        %v864 = vunpack.c.l.b16 %v856
        %v865 = vunpack.c.l.b16 %v857
        %v866 = vunpack.c.l.b16 %v858
        %v867 = vpack.c.b16 %v864, %v863
        %v868 = vpack.c.b16 %v866, %v865
        %vm871 = vcmask 261120
        %v873 = vsel %vm871, %v818, 0
        %v876 = vsel %vm871, %v819, 0
        %v879 = vsel %vm871, %v820, 0
        %v882 = vsel %vm871, %v821, 0
        %v885 = vsel %vm871, %v822, 0
        %v888 = vsel %vm871, %v823, 0
        %v891 = vsel %vm871, %v824, 0
        %v894 = vsel %vm871, %v825, 0
        %v897 = vsel %vm871, %v826, 0
        %v900 = vsel %vm871, %v827, 0
        %v903 = vsel %vm871, %v828, 0
        %v906 = vsel %vm871, %v829, 0
        %v909 = vsel %vm871, %v830, 0
        %v912 = vsel %vm871, %v831, 0
        %v915 = vsel %vm871, %v832, 0
        %v918 = vsel %vm871, %v833, 0
        %920 = vmatpush.bf16.msra.mxu0 0
        %921 = vmatpush.bf16.msra.mxu0 0
        %922 = vmatpush.bf16.msra.mxu0 0
        %923 = vmatpush.bf16.msra.mxu0 0
        %924 = vmatpush.bf16.msra.mxu0 0
        %925 = vmatpush.bf16.msra.mxu0 0
        %926 = vmatpush.bf16.msra.mxu0 %v868
        %927 = vmatpush.bf16.msra.mxu0 %v867
        %928 = vmatmul.bf16.gmra.mxu0 %v873
        %v929 = vpop.f32.mrf.mxu0
        %v930 = vadd.f32 0.0, %v929
        %v931 = vpop.f32.mrf.mxu0
        %v932 = vadd.f32 0.0, %v931
        %933 = vmatmul.bf16.gmra.mxu0 %v876
        %v934 = vpop.f32.mrf.mxu0
        %v935 = vadd.f32 0.0, %v934
        %v936 = vpop.f32.mrf.mxu0
        %v937 = vadd.f32 0.0, %v936
        %938 = vmatmul.bf16.gmra.mxu0 %v879
        %v939 = vpop.f32.mrf.mxu0
        %v940 = vadd.f32 0.0, %v939
        %v941 = vpop.f32.mrf.mxu0
        %v942 = vadd.f32 0.0, %v941
        %943 = vmatmul.bf16.gmra.mxu0 %v882
        %v944 = vpop.f32.mrf.mxu0
        %v945 = vadd.f32 0.0, %v944
        %v946 = vpop.f32.mrf.mxu0
        %v947 = vadd.f32 0.0, %v946
        %948 = vmatmul.bf16.gmra.mxu0 %v885
        %v949 = vpop.f32.mrf.mxu0
        %v950 = vadd.f32 0.0, %v949
        %v951 = vpop.f32.mrf.mxu0
        %v952 = vadd.f32 0.0, %v951
        %953 = vmatmul.bf16.gmra.mxu0 %v888
        %v954 = vpop.f32.mrf.mxu0
        %v955 = vadd.f32 0.0, %v954
        %v956 = vpop.f32.mrf.mxu0
        %v957 = vadd.f32 0.0, %v956
        %958 = vmatmul.bf16.gmra.mxu0 %v891
        %v959 = vpop.f32.mrf.mxu0
        %v960 = vadd.f32 0.0, %v959
        %v961 = vpop.f32.mrf.mxu0
        %v962 = vadd.f32 0.0, %v961
        %963 = vmatmul.bf16.gmra.mxu0 %v894
        %v964 = vpop.f32.mrf.mxu0
        %v965 = vadd.f32 0.0, %v964
        %v966 = vpop.f32.mrf.mxu0
        %v967 = vadd.f32 0.0, %v966
        %968 = vmatmul.bf16.gmra.mxu0 %v897
        %v969 = vpop.f32.mrf.mxu0
        %v970 = vadd.f32 0.0, %v969
        %v971 = vpop.f32.mrf.mxu0
        %v972 = vadd.f32 0.0, %v971
        %973 = vmatmul.bf16.gmra.mxu0 %v900
        %v974 = vpop.f32.mrf.mxu0
        %v975 = vadd.f32 0.0, %v974
        %v976 = vpop.f32.mrf.mxu0
        %v977 = vadd.f32 0.0, %v976
        %978 = vmatmul.bf16.gmra.mxu0 %v903
        %v979 = vpop.f32.mrf.mxu0
        %v980 = vadd.f32 0.0, %v979
        %v981 = vpop.f32.mrf.mxu0
        %v982 = vadd.f32 0.0, %v981
        %983 = vmatmul.bf16.gmra.mxu0 %v906
        %v984 = vpop.f32.mrf.mxu0
        %v985 = vadd.f32 0.0, %v984
        %v986 = vpop.f32.mrf.mxu0
        %v987 = vadd.f32 0.0, %v986
        %988 = vmatmul.bf16.gmra.mxu0 %v909
        %v989 = vpop.f32.mrf.mxu0
        %v990 = vadd.f32 0.0, %v989
        %v991 = vpop.f32.mrf.mxu0
        %v992 = vadd.f32 0.0, %v991
        %993 = vmatmul.bf16.gmra.mxu0 %v912
        %v994 = vpop.f32.mrf.mxu0
        %v995 = vadd.f32 0.0, %v994
        %v996 = vpop.f32.mrf.mxu0
        %v997 = vadd.f32 0.0, %v996
        %998 = vmatmul.bf16.gmra.mxu0 %v915
        %v999 = vpop.f32.mrf.mxu0
        %v1000 = vadd.f32 0.0, %v999
        %v1001 = vpop.f32.mrf.mxu0
        %v1002 = vadd.f32 0.0, %v1001
        %1003 = vmatmul.bf16.gmra.mxu0 %v918
        %v1004 = vpop.f32.mrf.mxu0
        %v1005 = vadd.f32 0.0, %v1004
        %v1006 = vpop.f32.mrf.mxu0
        %v1007 = vadd.f32 0.0, %v1006
        %1008 = vdwg.mxu0
        %v1013 = vunpack.c.l.b16 %v850
        %v1014 = vunpack.c.l.b16 %v851
        %v1015 = vunpack.c.l.b16 %v852
        %v1016 = vunpack.c.l.b16 %v853
        %v1017 = vpack.c.b16 %v1014, %v1013
        %v1018 = vpack.c.b16 %v1016, %v1015
        %v1022 = vsel %vm871, 0, 0
        %1024 = vmatpush.bf16.msra.mxu0 0
        %1025 = vmatpush.bf16.msra.mxu0 0
        %1026 = vmatpush.bf16.msra.mxu0 0
        %1027 = vmatpush.bf16.msra.mxu0 0
        %1028 = vmatpush.bf16.msra.mxu0 0
        %1029 = vmatpush.bf16.msra.mxu0 0
        %1030 = vmatpush.bf16.msra.mxu0 %v1018
        %1031 = vmatpush.bf16.msra.mxu0 %v1017
        %1032 = vmatmul.bf16.gmra.mxu0 %v1022
        %v1033 = vpop.f32.mrf.mxu0
        %v1034 = vadd.f32 %v930, %v1033
        %v1035 = vpop.f32.mrf.mxu0
        %v1036 = vadd.f32 %v932, %v1035
        %1037 = vmatmul.bf16.gmra.mxu0 %v873
        %v1038 = vpop.f32.mrf.mxu0
        %v1039 = vadd.f32 %v935, %v1038
        %v1040 = vpop.f32.mrf.mxu0
        %v1041 = vadd.f32 %v937, %v1040
        %1042 = vmatmul.bf16.gmra.mxu0 %v876
        %v1043 = vpop.f32.mrf.mxu0
        %v1044 = vadd.f32 %v940, %v1043
        %v1045 = vpop.f32.mrf.mxu0
        %v1046 = vadd.f32 %v942, %v1045
        %1047 = vmatmul.bf16.gmra.mxu0 %v879
        %v1048 = vpop.f32.mrf.mxu0
        %v1049 = vadd.f32 %v945, %v1048
        %v1050 = vpop.f32.mrf.mxu0
        %v1051 = vadd.f32 %v947, %v1050
        %1052 = vmatmul.bf16.gmra.mxu0 %v882
        %v1053 = vpop.f32.mrf.mxu0
        %v1054 = vadd.f32 %v950, %v1053
        %v1055 = vpop.f32.mrf.mxu0
        %v1056 = vadd.f32 %v952, %v1055
        %1057 = vmatmul.bf16.gmra.mxu0 %v885
        %v1058 = vpop.f32.mrf.mxu0
        %v1059 = vadd.f32 %v955, %v1058
        %v1060 = vpop.f32.mrf.mxu0
        %v1061 = vadd.f32 %v957, %v1060
        %1062 = vmatmul.bf16.gmra.mxu0 %v888
        %v1063 = vpop.f32.mrf.mxu0
        %v1064 = vadd.f32 %v960, %v1063
        %v1065 = vpop.f32.mrf.mxu0
        %v1066 = vadd.f32 %v962, %v1065
        %1067 = vmatmul.bf16.gmra.mxu0 %v891
        %v1068 = vpop.f32.mrf.mxu0
        %v1069 = vadd.f32 %v965, %v1068
        %v1070 = vpop.f32.mrf.mxu0
        %v1071 = vadd.f32 %v967, %v1070
        %1072 = vmatmul.bf16.gmra.mxu0 %v894
        %v1073 = vpop.f32.mrf.mxu0
        %v1074 = vadd.f32 %v970, %v1073
        %v1075 = vpop.f32.mrf.mxu0
        %v1076 = vadd.f32 %v972, %v1075
        %1077 = vmatmul.bf16.gmra.mxu0 %v897
        %v1078 = vpop.f32.mrf.mxu0
        %v1079 = vadd.f32 %v975, %v1078
        %v1080 = vpop.f32.mrf.mxu0
        %v1081 = vadd.f32 %v977, %v1080
        %1082 = vmatmul.bf16.gmra.mxu0 %v900
        %v1083 = vpop.f32.mrf.mxu0
        %v1084 = vadd.f32 %v980, %v1083
        %v1085 = vpop.f32.mrf.mxu0
        %v1086 = vadd.f32 %v982, %v1085
        %1087 = vmatmul.bf16.gmra.mxu0 %v903
        %v1088 = vpop.f32.mrf.mxu0
        %v1089 = vadd.f32 %v985, %v1088
        %v1090 = vpop.f32.mrf.mxu0
        %v1091 = vadd.f32 %v987, %v1090
        %1092 = vmatmul.bf16.gmra.mxu0 %v906
        %v1093 = vpop.f32.mrf.mxu0
        %v1094 = vadd.f32 %v990, %v1093
        %v1095 = vpop.f32.mrf.mxu0
        %v1096 = vadd.f32 %v992, %v1095
        %1097 = vmatmul.bf16.gmra.mxu0 %v909
        %v1098 = vpop.f32.mrf.mxu0
        %v1099 = vadd.f32 %v995, %v1098
        %v1100 = vpop.f32.mrf.mxu0
        %v1101 = vadd.f32 %v997, %v1100
        %1102 = vmatmul.bf16.gmra.mxu0 %v912
        %v1103 = vpop.f32.mrf.mxu0
        %v1104 = vadd.f32 %v1000, %v1103
        %v1105 = vpop.f32.mrf.mxu0
        %v1106 = vadd.f32 %v1002, %v1105
        %1107 = vmatmul.bf16.gmra.mxu0 %v915
        %v1108 = vpop.f32.mrf.mxu0
        %v1109 = vadd.f32 %v1005, %v1108
        %v1110 = vpop.f32.mrf.mxu0
        %v1111 = vadd.f32 %v1007, %v1110
        %1112 = vdwg.mxu0
        %s1113 = scalar_lea.vmem %s3, 96
        %v1114 = vld [vmem:[%s1113] sm:$0xf]
        %v1115 = vld [vmem:[%s1113 + $0x4] sm:$0xf]
        %v1116 = vld [vmem:[%s1113 + $0x8] sm:$0xf]
        %v1117 = vld [vmem:[%s1113 + $0xc] sm:$0xf]
        %v1122 = vunpack.c.l.b16 %v1114
        %v1123 = vunpack.c.l.b16 %v1115
        %v1124 = vunpack.c.l.b16 %v1116
        %v1125 = vunpack.c.l.b16 %v1117
        %v1126 = vpack.c.b16 %v1123, %v1122
        %v1127 = vpack.c.b16 %v1125, %v1124
        %1130 = vmatpush.bf16.msra.mxu0 0
        %1131 = vmatpush.bf16.msra.mxu0 0
        %1132 = vmatpush.bf16.msra.mxu0 0
        %1133 = vmatpush.bf16.msra.mxu0 0
        %1134 = vmatpush.bf16.msra.mxu0 0
        %1135 = vmatpush.bf16.msra.mxu0 0
        %1136 = vmatpush.bf16.msra.mxu0 %v1127
        %1137 = vmatpush.bf16.msra.mxu0 %v1126
        %1138 = vmatmul.bf16.gmra.mxu0 %v876
        %v1139 = vpop.f32.mrf.mxu0
        %v1140 = vadd.f32 0.0, %v1139
        %v1141 = vpop.f32.mrf.mxu0
        %v1142 = vadd.f32 0.0, %v1141
        %1143 = vmatmul.bf16.gmra.mxu0 %v879
        %v1144 = vpop.f32.mrf.mxu0
        %v1145 = vadd.f32 0.0, %v1144
        %v1146 = vpop.f32.mrf.mxu0
        %v1147 = vadd.f32 0.0, %v1146
        %1148 = vmatmul.bf16.gmra.mxu0 %v882
        %v1149 = vpop.f32.mrf.mxu0
        %v1150 = vadd.f32 0.0, %v1149
        %v1151 = vpop.f32.mrf.mxu0
        %v1152 = vadd.f32 0.0, %v1151
        %1153 = vmatmul.bf16.gmra.mxu0 %v885
        %v1154 = vpop.f32.mrf.mxu0
        %v1155 = vadd.f32 0.0, %v1154
        %v1156 = vpop.f32.mrf.mxu0
        %v1157 = vadd.f32 0.0, %v1156
        %1158 = vmatmul.bf16.gmra.mxu0 %v888
        %v1159 = vpop.f32.mrf.mxu0
        %v1160 = vadd.f32 0.0, %v1159
        %v1161 = vpop.f32.mrf.mxu0
        %v1162 = vadd.f32 0.0, %v1161
        %1163 = vmatmul.bf16.gmra.mxu0 %v891
        %v1164 = vpop.f32.mrf.mxu0
        %v1165 = vadd.f32 0.0, %v1164
        %v1166 = vpop.f32.mrf.mxu0
        %v1167 = vadd.f32 0.0, %v1166
        %1168 = vmatmul.bf16.gmra.mxu0 %v894
        %v1169 = vpop.f32.mrf.mxu0
        %v1170 = vadd.f32 0.0, %v1169
        %v1171 = vpop.f32.mrf.mxu0
        %v1172 = vadd.f32 0.0, %v1171
        %1173 = vmatmul.bf16.gmra.mxu0 %v897
        %v1174 = vpop.f32.mrf.mxu0
        %v1175 = vadd.f32 0.0, %v1174
        %v1176 = vpop.f32.mrf.mxu0
        %v1177 = vadd.f32 0.0, %v1176
        %1178 = vmatmul.bf16.gmra.mxu0 %v900
        %v1179 = vpop.f32.mrf.mxu0
        %v1180 = vadd.f32 0.0, %v1179
        %v1181 = vpop.f32.mrf.mxu0
        %v1182 = vadd.f32 0.0, %v1181
        %1183 = vmatmul.bf16.gmra.mxu0 %v903
        %v1184 = vpop.f32.mrf.mxu0
        %v1185 = vadd.f32 0.0, %v1184
        %v1186 = vpop.f32.mrf.mxu0
        %v1187 = vadd.f32 0.0, %v1186
        %1188 = vmatmul.bf16.gmra.mxu0 %v906
        %v1189 = vpop.f32.mrf.mxu0
        %v1190 = vadd.f32 0.0, %v1189
        %v1191 = vpop.f32.mrf.mxu0
        %v1192 = vadd.f32 0.0, %v1191
        %1193 = vmatmul.bf16.gmra.mxu0 %v909
        %v1194 = vpop.f32.mrf.mxu0
        %v1195 = vadd.f32 0.0, %v1194
        %v1196 = vpop.f32.mrf.mxu0
        %v1197 = vadd.f32 0.0, %v1196
        %1198 = vmatmul.bf16.gmra.mxu0 %v912
        %v1199 = vpop.f32.mrf.mxu0
        %v1200 = vadd.f32 0.0, %v1199
        %v1201 = vpop.f32.mrf.mxu0
        %v1202 = vadd.f32 0.0, %v1201
        %1203 = vmatmul.bf16.gmra.mxu0 %v915
        %v1204 = vpop.f32.mrf.mxu0
        %v1205 = vadd.f32 0.0, %v1204
        %v1206 = vpop.f32.mrf.mxu0
        %v1207 = vadd.f32 0.0, %v1206
        %1208 = vmatmul.bf16.gmra.mxu0 %v918
        %v1209 = vpop.f32.mrf.mxu0
        %v1210 = vadd.f32 0.0, %v1209
        %v1211 = vpop.f32.mrf.mxu0
        %v1212 = vadd.f32 0.0, %v1211
        %1213 = vmatmul.bf16.gmra.mxu0 %v1022
        %v1214 = vpop.f32.mrf.mxu0
        %v1215 = vadd.f32 0.0, %v1214
        %v1216 = vpop.f32.mrf.mxu0
        %v1217 = vadd.f32 0.0, %v1216
        %1218 = vdwg.mxu0
        %v1219 = vadd.f32 %v1034, %v1140
        %v1220 = vadd.f32 %v1036, %v1142
        %v1221 = vadd.f32 %v1039, %v1145
        %v1222 = vadd.f32 %v1041, %v1147
        %v1223 = vadd.f32 %v1044, %v1150
        %v1224 = vadd.f32 %v1046, %v1152
        %v1225 = vadd.f32 %v1049, %v1155
        %v1226 = vadd.f32 %v1051, %v1157
        %v1227 = vadd.f32 %v1054, %v1160
        %v1228 = vadd.f32 %v1056, %v1162
        %v1229 = vadd.f32 %v1059, %v1165
        %v1230 = vadd.f32 %v1061, %v1167
        %v1231 = vadd.f32 %v1064, %v1170
        %v1232 = vadd.f32 %v1066, %v1172
        %v1233 = vadd.f32 %v1069, %v1175
        %v1234 = vadd.f32 %v1071, %v1177
        %v1235 = vadd.f32 %v1074, %v1180
        %v1236 = vadd.f32 %v1076, %v1182
        %v1237 = vadd.f32 %v1079, %v1185
        %v1238 = vadd.f32 %v1081, %v1187
        %v1239 = vadd.f32 %v1084, %v1190
        %v1240 = vadd.f32 %v1086, %v1192
        %v1241 = vadd.f32 %v1089, %v1195
        %v1242 = vadd.f32 %v1091, %v1197
        %v1243 = vadd.f32 %v1094, %v1200
        %v1244 = vadd.f32 %v1096, %v1202
        %v1245 = vadd.f32 %v1099, %v1205
        %v1246 = vadd.f32 %v1101, %v1207
        %v1247 = vadd.f32 %v1104, %v1210
        %v1248 = vadd.f32 %v1106, %v1212
        %v1249 = vadd.f32 %v1109, %v1215
        %v1250 = vadd.f32 %v1111, %v1217
        %vm1251 = vsmask.f32 7424
        %v1252 = vshrl.u32 0, 16
        %v1254 = vshll.u32 0, 16
        %v1256 = vrot.slane %v1254, 1
        %v1257 = vor.u32 %v1252, %v1256
        %v1258 = vsel %vm1251, %v1257, %v1256
        %v1259 = vshrl.u32 %v818, 16
        %v1261 = vshll.u32 %v818, 16
        %v1263 = vrot.slane %v1261, 1
        %v1264 = vor.u32 %v1259, %v1263
        %v1266 = vshll.u32 %v834, 16
        %v1268 = vrot.slane %v1266, 1
        %v1269 = vsel %vm1251, %v1264, %v1268
        %v1270 = vshrl.u32 %v819, 16
        %v1272 = vshll.u32 %v819, 16
        %v1274 = vrot.slane %v1272, 1
        %v1275 = vor.u32 %v1270, %v1274
        %v1277 = vshll.u32 %v835, 16
        %v1279 = vrot.slane %v1277, 1
        %v1280 = vsel %vm1251, %v1275, %v1279
        %v1281 = vshrl.u32 %v820, 16
        %v1283 = vshll.u32 %v820, 16
        %v1285 = vrot.slane %v1283, 1
        %v1286 = vor.u32 %v1281, %v1285
        %v1288 = vshll.u32 %v836, 16
        %v1290 = vrot.slane %v1288, 1
        %v1291 = vsel %vm1251, %v1286, %v1290
        %v1292 = vshrl.u32 %v821, 16
        %v1294 = vshll.u32 %v821, 16
        %v1296 = vrot.slane %v1294, 1
        %v1297 = vor.u32 %v1292, %v1296
        %v1299 = vshll.u32 %v837, 16
        %v1301 = vrot.slane %v1299, 1
        %v1302 = vsel %vm1251, %v1297, %v1301
        %v1303 = vshrl.u32 %v822, 16
        %v1305 = vshll.u32 %v822, 16
        %v1307 = vrot.slane %v1305, 1
        %v1308 = vor.u32 %v1303, %v1307
        %v1310 = vshll.u32 %v838, 16
        %v1312 = vrot.slane %v1310, 1
        %v1313 = vsel %vm1251, %v1308, %v1312
        %v1314 = vshrl.u32 %v823, 16
        %v1316 = vshll.u32 %v823, 16
        %v1318 = vrot.slane %v1316, 1
        %v1319 = vor.u32 %v1314, %v1318
        %v1321 = vshll.u32 %v839, 16
        %v1323 = vrot.slane %v1321, 1
        %v1324 = vsel %vm1251, %v1319, %v1323
        %v1325 = vshrl.u32 %v824, 16
        %v1327 = vshll.u32 %v824, 16
        %v1329 = vrot.slane %v1327, 1
        %v1330 = vor.u32 %v1325, %v1329
        %v1332 = vshll.u32 %v840, 16
        %v1334 = vrot.slane %v1332, 1
        %v1335 = vsel %vm1251, %v1330, %v1334
        %v1336 = vshrl.u32 %v825, 16
        %v1338 = vshll.u32 %v825, 16
        %v1340 = vrot.slane %v1338, 1
        %v1341 = vor.u32 %v1336, %v1340
        %v1343 = vshll.u32 %v841, 16
        %v1345 = vrot.slane %v1343, 1
        %v1346 = vsel %vm1251, %v1341, %v1345
        %v1347 = vshrl.u32 %v826, 16
        %v1349 = vshll.u32 %v826, 16
        %v1351 = vrot.slane %v1349, 1
        %v1352 = vor.u32 %v1347, %v1351
        %v1354 = vshll.u32 %v842, 16
        %v1356 = vrot.slane %v1354, 1
        %v1357 = vsel %vm1251, %v1352, %v1356
        %v1358 = vshrl.u32 %v827, 16
        %v1360 = vshll.u32 %v827, 16
        %v1362 = vrot.slane %v1360, 1
        %v1363 = vor.u32 %v1358, %v1362
        %v1365 = vshll.u32 %v843, 16
        %v1367 = vrot.slane %v1365, 1
        %v1368 = vsel %vm1251, %v1363, %v1367
        %v1369 = vshrl.u32 %v828, 16
        %v1371 = vshll.u32 %v828, 16
        %v1373 = vrot.slane %v1371, 1
        %v1374 = vor.u32 %v1369, %v1373
        %v1376 = vshll.u32 %v844, 16
        %v1378 = vrot.slane %v1376, 1
        %v1379 = vsel %vm1251, %v1374, %v1378
        %v1380 = vshrl.u32 %v829, 16
        %v1382 = vshll.u32 %v829, 16
        %v1384 = vrot.slane %v1382, 1
        %v1385 = vor.u32 %v1380, %v1384
        %v1387 = vshll.u32 %v845, 16
        %v1389 = vrot.slane %v1387, 1
        %v1390 = vsel %vm1251, %v1385, %v1389
        %v1391 = vshrl.u32 %v830, 16
        %v1393 = vshll.u32 %v830, 16
        %v1395 = vrot.slane %v1393, 1
        %v1396 = vor.u32 %v1391, %v1395
        %v1398 = vshll.u32 %v846, 16
        %v1400 = vrot.slane %v1398, 1
        %v1401 = vsel %vm1251, %v1396, %v1400
        %v1402 = vshrl.u32 %v831, 16
        %v1404 = vshll.u32 %v831, 16
        %v1406 = vrot.slane %v1404, 1
        %v1407 = vor.u32 %v1402, %v1406
        %v1409 = vshll.u32 %v847, 16
        %v1411 = vrot.slane %v1409, 1
        %v1412 = vsel %vm1251, %v1407, %v1411
        %v1413 = vshrl.u32 %v832, 16
        %v1415 = vshll.u32 %v832, 16
        %v1417 = vrot.slane %v1415, 1
        %v1418 = vor.u32 %v1413, %v1417
        %v1420 = vshll.u32 %v848, 16
        %v1422 = vrot.slane %v1420, 1
        %v1423 = vsel %vm1251, %v1418, %v1422
        %v1424 = vshrl.u32 %v833, 16
        %v1426 = vshll.u32 %v833, 16
        %v1428 = vrot.slane %v1426, 1
        %v1429 = vor.u32 %v1424, %v1428
        %v1431 = vshll.u32 %v849, 16
        %v1433 = vrot.slane %v1431, 1
        %v1434 = vsel %vm1251, %v1429, %v1433
        %s1435 = scalar_lea.vmem %s3, 16
        %v1436 = vld [vmem:[%s1435] sm:$0xf]
        %v1437 = vld [vmem:[%s1435 + $0x4] sm:$0xf]
        %v1438 = vld [vmem:[%s1435 + $0x8] sm:$0xf]
        %v1439 = vld [vmem:[%s1435 + $0xc] sm:$0xf]
        %v1444 = vunpack.c.l.b16 %v1436
        %v1445 = vunpack.c.l.b16 %v1437
        %v1446 = vunpack.c.l.b16 %v1438
        %v1447 = vunpack.c.l.b16 %v1439
        %v1448 = vpack.c.b16 %v1445, %v1444
        %v1449 = vpack.c.b16 %v1447, %v1446
        %v1453 = vsel %vm871, %v1258, 0
        %v1456 = vsel %vm871, %v1269, 0
        %v1459 = vsel %vm871, %v1280, 0
        %v1462 = vsel %vm871, %v1291, 0
        %v1465 = vsel %vm871, %v1302, 0
        %v1468 = vsel %vm871, %v1313, 0
        %v1471 = vsel %vm871, %v1324, 0
        %v1474 = vsel %vm871, %v1335, 0
        %v1477 = vsel %vm871, %v1346, 0
        %v1480 = vsel %vm871, %v1357, 0
        %v1483 = vsel %vm871, %v1368, 0
        %v1486 = vsel %vm871, %v1379, 0
        %v1489 = vsel %vm871, %v1390, 0
        %v1492 = vsel %vm871, %v1401, 0
        %v1495 = vsel %vm871, %v1412, 0
        %v1498 = vsel %vm871, %v1423, 0
        %1500 = vmatpush.bf16.msra.mxu0 0
        %1501 = vmatpush.bf16.msra.mxu0 0
        %1502 = vmatpush.bf16.msra.mxu0 0
        %1503 = vmatpush.bf16.msra.mxu0 0
        %1504 = vmatpush.bf16.msra.mxu0 0
        %1505 = vmatpush.bf16.msra.mxu0 0
        %1506 = vmatpush.bf16.msra.mxu0 %v1449
        %1507 = vmatpush.bf16.msra.mxu0 %v1448
        %1508 = vmatmul.bf16.gmra.mxu0 %v1453
        %v1509 = vpop.f32.mrf.mxu0
        %v1510 = vadd.f32 0.0, %v1509
        %v1511 = vpop.f32.mrf.mxu0
        %v1512 = vadd.f32 0.0, %v1511
        %1513 = vmatmul.bf16.gmra.mxu0 %v1456
        %v1514 = vpop.f32.mrf.mxu0
        %v1515 = vadd.f32 0.0, %v1514
        %v1516 = vpop.f32.mrf.mxu0
        %v1517 = vadd.f32 0.0, %v1516
        %1518 = vmatmul.bf16.gmra.mxu0 %v1459
        %v1519 = vpop.f32.mrf.mxu0
        %v1520 = vadd.f32 0.0, %v1519
        %v1521 = vpop.f32.mrf.mxu0
        %v1522 = vadd.f32 0.0, %v1521
        %1523 = vmatmul.bf16.gmra.mxu0 %v1462
        %v1524 = vpop.f32.mrf.mxu0
        %v1525 = vadd.f32 0.0, %v1524
        %v1526 = vpop.f32.mrf.mxu0
        %v1527 = vadd.f32 0.0, %v1526
        %1528 = vmatmul.bf16.gmra.mxu0 %v1465
        %v1529 = vpop.f32.mrf.mxu0
        %v1530 = vadd.f32 0.0, %v1529
        %v1531 = vpop.f32.mrf.mxu0
        %v1532 = vadd.f32 0.0, %v1531
        %1533 = vmatmul.bf16.gmra.mxu0 %v1468
        %v1534 = vpop.f32.mrf.mxu0
        %v1535 = vadd.f32 0.0, %v1534
        %v1536 = vpop.f32.mrf.mxu0
        %v1537 = vadd.f32 0.0, %v1536
        %1538 = vmatmul.bf16.gmra.mxu0 %v1471
        %v1539 = vpop.f32.mrf.mxu0
        %v1540 = vadd.f32 0.0, %v1539
        %v1541 = vpop.f32.mrf.mxu0
        %v1542 = vadd.f32 0.0, %v1541
        %1543 = vmatmul.bf16.gmra.mxu0 %v1474
        %v1544 = vpop.f32.mrf.mxu0
        %v1545 = vadd.f32 0.0, %v1544
        %v1546 = vpop.f32.mrf.mxu0
        %v1547 = vadd.f32 0.0, %v1546
        %1548 = vmatmul.bf16.gmra.mxu0 %v1477
        %v1549 = vpop.f32.mrf.mxu0
        %v1550 = vadd.f32 0.0, %v1549
        %v1551 = vpop.f32.mrf.mxu0
        %v1552 = vadd.f32 0.0, %v1551
        %1553 = vmatmul.bf16.gmra.mxu0 %v1480
        %v1554 = vpop.f32.mrf.mxu0
        %v1555 = vadd.f32 0.0, %v1554
        %v1556 = vpop.f32.mrf.mxu0
        %v1557 = vadd.f32 0.0, %v1556
        %1558 = vmatmul.bf16.gmra.mxu0 %v1483
        %v1559 = vpop.f32.mrf.mxu0
        %v1560 = vadd.f32 0.0, %v1559
        %v1561 = vpop.f32.mrf.mxu0
        %v1562 = vadd.f32 0.0, %v1561
        %1563 = vmatmul.bf16.gmra.mxu0 %v1486
        %v1564 = vpop.f32.mrf.mxu0
        %v1565 = vadd.f32 0.0, %v1564
        %v1566 = vpop.f32.mrf.mxu0
        %v1567 = vadd.f32 0.0, %v1566
        %1568 = vmatmul.bf16.gmra.mxu0 %v1489
        %v1569 = vpop.f32.mrf.mxu0
        %v1570 = vadd.f32 0.0, %v1569
        %v1571 = vpop.f32.mrf.mxu0
        %v1572 = vadd.f32 0.0, %v1571
        %1573 = vmatmul.bf16.gmra.mxu0 %v1492
        %v1574 = vpop.f32.mrf.mxu0
        %v1575 = vadd.f32 0.0, %v1574
        %v1576 = vpop.f32.mrf.mxu0
        %v1577 = vadd.f32 0.0, %v1576
        %1578 = vmatmul.bf16.gmra.mxu0 %v1495
        %v1579 = vpop.f32.mrf.mxu0
        %v1580 = vadd.f32 0.0, %v1579
        %v1581 = vpop.f32.mrf.mxu0
        %v1582 = vadd.f32 0.0, %v1581
        %1583 = vmatmul.bf16.gmra.mxu0 %v1498
        %v1584 = vpop.f32.mrf.mxu0
        %v1585 = vadd.f32 0.0, %v1584
        %v1586 = vpop.f32.mrf.mxu0
        %v1587 = vadd.f32 0.0, %v1586
        %1588 = vdwg.mxu0
        %v1589 = vadd.f32 %v1219, %v1510
        %v1590 = vadd.f32 %v1220, %v1512
        %v1591 = vadd.f32 %v1221, %v1515
        %v1592 = vadd.f32 %v1222, %v1517
        %v1593 = vadd.f32 %v1223, %v1520
        %v1594 = vadd.f32 %v1224, %v1522
        %v1595 = vadd.f32 %v1225, %v1525
        %v1596 = vadd.f32 %v1226, %v1527
        %v1597 = vadd.f32 %v1227, %v1530
        %v1598 = vadd.f32 %v1228, %v1532
        %v1599 = vadd.f32 %v1229, %v1535
        %v1600 = vadd.f32 %v1230, %v1537
        %v1601 = vadd.f32 %v1231, %v1540
        %v1602 = vadd.f32 %v1232, %v1542
        %v1603 = vadd.f32 %v1233, %v1545
        %v1604 = vadd.f32 %v1234, %v1547
        %v1605 = vadd.f32 %v1235, %v1550
        %v1606 = vadd.f32 %v1236, %v1552
        %v1607 = vadd.f32 %v1237, %v1555
        %v1608 = vadd.f32 %v1238, %v1557
        %v1609 = vadd.f32 %v1239, %v1560
        %v1610 = vadd.f32 %v1240, %v1562
        %v1611 = vadd.f32 %v1241, %v1565
        %v1612 = vadd.f32 %v1242, %v1567
        %v1613 = vadd.f32 %v1243, %v1570
        %v1614 = vadd.f32 %v1244, %v1572
        %v1615 = vadd.f32 %v1245, %v1575
        %v1616 = vadd.f32 %v1246, %v1577
        %v1617 = vadd.f32 %v1247, %v1580
        %v1618 = vadd.f32 %v1248, %v1582
        %v1619 = vadd.f32 %v1249, %v1585
        %v1620 = vadd.f32 %v1250, %v1587
        %s1621 = scalar_lea.vmem %s3, 64
        %v1622 = vld [vmem:[%s1621] sm:$0xf]
        %v1623 = vld [vmem:[%s1621 + $0x4] sm:$0xf]
        %v1624 = vld [vmem:[%s1621 + $0x8] sm:$0xf]
        %v1625 = vld [vmem:[%s1621 + $0xc] sm:$0xf]
        %v1630 = vunpack.c.l.b16 %v1622
        %v1631 = vunpack.c.l.b16 %v1623
        %v1632 = vunpack.c.l.b16 %v1624
        %v1633 = vunpack.c.l.b16 %v1625
        %v1634 = vpack.c.b16 %v1631, %v1630
        %v1635 = vpack.c.b16 %v1633, %v1632
        %v1639 = vsel %vm871, %v1434, 0
        %1641 = vmatpush.bf16.msra.mxu0 0
        %1642 = vmatpush.bf16.msra.mxu0 0
        %1643 = vmatpush.bf16.msra.mxu0 0
        %1644 = vmatpush.bf16.msra.mxu0 0
        %1645 = vmatpush.bf16.msra.mxu0 0
        %1646 = vmatpush.bf16.msra.mxu0 0
        %1647 = vmatpush.bf16.msra.mxu0 %v1635
        %1648 = vmatpush.bf16.msra.mxu0 %v1634
        %1649 = vmatmul.bf16.gmra.mxu0 %v1456
        %v1650 = vpop.f32.mrf.mxu0
        %v1651 = vadd.f32 0.0, %v1650
        %v1652 = vpop.f32.mrf.mxu0
        %v1653 = vadd.f32 0.0, %v1652
        %1654 = vmatmul.bf16.gmra.mxu0 %v1459
        %v1655 = vpop.f32.mrf.mxu0
        %v1656 = vadd.f32 0.0, %v1655
        %v1657 = vpop.f32.mrf.mxu0
        %v1658 = vadd.f32 0.0, %v1657
        %1659 = vmatmul.bf16.gmra.mxu0 %v1462
        %v1660 = vpop.f32.mrf.mxu0
        %v1661 = vadd.f32 0.0, %v1660
        %v1662 = vpop.f32.mrf.mxu0
        %v1663 = vadd.f32 0.0, %v1662
        %1664 = vmatmul.bf16.gmra.mxu0 %v1465
        %v1665 = vpop.f32.mrf.mxu0
        %v1666 = vadd.f32 0.0, %v1665
        %v1667 = vpop.f32.mrf.mxu0
        %v1668 = vadd.f32 0.0, %v1667
        %1669 = vmatmul.bf16.gmra.mxu0 %v1468
        %v1670 = vpop.f32.mrf.mxu0
        %v1671 = vadd.f32 0.0, %v1670
        %v1672 = vpop.f32.mrf.mxu0
        %v1673 = vadd.f32 0.0, %v1672
        %1674 = vmatmul.bf16.gmra.mxu0 %v1471
        %v1675 = vpop.f32.mrf.mxu0
        %v1676 = vadd.f32 0.0, %v1675
        %v1677 = vpop.f32.mrf.mxu0
        %v1678 = vadd.f32 0.0, %v1677
        %1679 = vmatmul.bf16.gmra.mxu0 %v1474
        %v1680 = vpop.f32.mrf.mxu0
        %v1681 = vadd.f32 0.0, %v1680
        %v1682 = vpop.f32.mrf.mxu0
        %v1683 = vadd.f32 0.0, %v1682
        %1684 = vmatmul.bf16.gmra.mxu0 %v1477
        %v1685 = vpop.f32.mrf.mxu0
        %v1686 = vadd.f32 0.0, %v1685
        %v1687 = vpop.f32.mrf.mxu0
        %v1688 = vadd.f32 0.0, %v1687
        %1689 = vmatmul.bf16.gmra.mxu0 %v1480
        %v1690 = vpop.f32.mrf.mxu0
        %v1691 = vadd.f32 0.0, %v1690
        %v1692 = vpop.f32.mrf.mxu0
        %v1693 = vadd.f32 0.0, %v1692
        %1694 = vmatmul.bf16.gmra.mxu0 %v1483
        %v1695 = vpop.f32.mrf.mxu0
        %v1696 = vadd.f32 0.0, %v1695
        %v1697 = vpop.f32.mrf.mxu0
        %v1698 = vadd.f32 0.0, %v1697
        %1699 = vmatmul.bf16.gmra.mxu0 %v1486
        %v1700 = vpop.f32.mrf.mxu0
        %v1701 = vadd.f32 0.0, %v1700
        %v1702 = vpop.f32.mrf.mxu0
        %v1703 = vadd.f32 0.0, %v1702
        %1704 = vmatmul.bf16.gmra.mxu0 %v1489
        %v1705 = vpop.f32.mrf.mxu0
        %v1706 = vadd.f32 0.0, %v1705
        %v1707 = vpop.f32.mrf.mxu0
        %v1708 = vadd.f32 0.0, %v1707
        %1709 = vmatmul.bf16.gmra.mxu0 %v1492
        %v1710 = vpop.f32.mrf.mxu0
        %v1711 = vadd.f32 0.0, %v1710
        %v1712 = vpop.f32.mrf.mxu0
        %v1713 = vadd.f32 0.0, %v1712
        %1714 = vmatmul.bf16.gmra.mxu0 %v1495
        %v1715 = vpop.f32.mrf.mxu0
        %v1716 = vadd.f32 0.0, %v1715
        %v1717 = vpop.f32.mrf.mxu0
        %v1718 = vadd.f32 0.0, %v1717
        %1719 = vmatmul.bf16.gmra.mxu0 %v1498
        %v1720 = vpop.f32.mrf.mxu0
        %v1721 = vadd.f32 0.0, %v1720
        %v1722 = vpop.f32.mrf.mxu0
        %v1723 = vadd.f32 0.0, %v1722
        %1724 = vmatmul.bf16.gmra.mxu0 %v1639
        %v1725 = vpop.f32.mrf.mxu0
        %v1726 = vadd.f32 0.0, %v1725
        %v1727 = vpop.f32.mrf.mxu0
        %v1728 = vadd.f32 0.0, %v1727
        %1729 = vdwg.mxu0
        %v1730 = vadd.f32 %v1589, %v1651
        %v1731 = vadd.f32 %v1590, %v1653
        %v1732 = vadd.f32 %v1591, %v1656
        %v1733 = vadd.f32 %v1592, %v1658
        %v1734 = vadd.f32 %v1593, %v1661
        %v1735 = vadd.f32 %v1594, %v1663
        %v1736 = vadd.f32 %v1595, %v1666
        %v1737 = vadd.f32 %v1596, %v1668
        %v1738 = vadd.f32 %v1597, %v1671
        %v1739 = vadd.f32 %v1598, %v1673
        %v1740 = vadd.f32 %v1599, %v1676
        %v1741 = vadd.f32 %v1600, %v1678
        %v1742 = vadd.f32 %v1601, %v1681
        %v1743 = vadd.f32 %v1602, %v1683
        %v1744 = vadd.f32 %v1603, %v1686
        %v1745 = vadd.f32 %v1604, %v1688
        %v1746 = vadd.f32 %v1605, %v1691
        %v1747 = vadd.f32 %v1606, %v1693
        %v1748 = vadd.f32 %v1607, %v1696
        %v1749 = vadd.f32 %v1608, %v1698
        %v1750 = vadd.f32 %v1609, %v1701
        %v1751 = vadd.f32 %v1610, %v1703
        %v1752 = vadd.f32 %v1611, %v1706
        %v1753 = vadd.f32 %v1612, %v1708
        %v1754 = vadd.f32 %v1613, %v1711
        %v1755 = vadd.f32 %v1614, %v1713
        %v1756 = vadd.f32 %v1615, %v1716
        %v1757 = vadd.f32 %v1616, %v1718
        %v1758 = vadd.f32 %v1617, %v1721
        %v1759 = vadd.f32 %v1618, %v1723
        %v1760 = vadd.f32 %v1619, %v1726
        %v1761 = vadd.f32 %v1620, %v1728
        %s1762 = scalar_lea.vmem %s3, 112
        %v1763 = vld [vmem:[%s1762] sm:$0xf]
        %v1764 = vld [vmem:[%s1762 + $0x4] sm:$0xf]
        %v1765 = vld [vmem:[%s1762 + $0x8] sm:$0xf]
        %v1766 = vld [vmem:[%s1762 + $0xc] sm:$0xf]
        %v1771 = vunpack.c.l.b16 %v1763
        %v1772 = vunpack.c.l.b16 %v1764
        %v1773 = vunpack.c.l.b16 %v1765
        %v1774 = vunpack.c.l.b16 %v1766
        %v1775 = vpack.c.b16 %v1772, %v1771
        %v1776 = vpack.c.b16 %v1774, %v1773
        %1779 = vmatpush.bf16.msra.mxu0 0
        %1780 = vmatpush.bf16.msra.mxu0 0
        %1781 = vmatpush.bf16.msra.mxu0 0
        %1782 = vmatpush.bf16.msra.mxu0 0
        %1783 = vmatpush.bf16.msra.mxu0 0
        %1784 = vmatpush.bf16.msra.mxu0 0
        %1785 = vmatpush.bf16.msra.mxu0 %v1776
        %1786 = vmatpush.bf16.msra.mxu0 %v1775
        %1787 = vmatmul.bf16.gmra.mxu0 %v1459
        %v1788 = vpop.f32.mrf.mxu0
        %v1789 = vadd.f32 0.0, %v1788
        %v1790 = vpop.f32.mrf.mxu0
        %v1791 = vadd.f32 0.0, %v1790
        %1792 = vmatmul.bf16.gmra.mxu0 %v1462
        %v1793 = vpop.f32.mrf.mxu0
        %v1794 = vadd.f32 0.0, %v1793
        %v1795 = vpop.f32.mrf.mxu0
        %v1796 = vadd.f32 0.0, %v1795
        %1797 = vmatmul.bf16.gmra.mxu0 %v1465
        %v1798 = vpop.f32.mrf.mxu0
        %v1799 = vadd.f32 0.0, %v1798
        %v1800 = vpop.f32.mrf.mxu0
        %v1801 = vadd.f32 0.0, %v1800
        %1802 = vmatmul.bf16.gmra.mxu0 %v1468
        %v1803 = vpop.f32.mrf.mxu0
        %v1804 = vadd.f32 0.0, %v1803
        %v1805 = vpop.f32.mrf.mxu0
        %v1806 = vadd.f32 0.0, %v1805
        %1807 = vmatmul.bf16.gmra.mxu0 %v1471
        %v1808 = vpop.f32.mrf.mxu0
        %v1809 = vadd.f32 0.0, %v1808
        %v1810 = vpop.f32.mrf.mxu0
        %v1811 = vadd.f32 0.0, %v1810
        %1812 = vmatmul.bf16.gmra.mxu0 %v1474
        %v1813 = vpop.f32.mrf.mxu0
        %v1814 = vadd.f32 0.0, %v1813
        %v1815 = vpop.f32.mrf.mxu0
        %v1816 = vadd.f32 0.0, %v1815
        %1817 = vmatmul.bf16.gmra.mxu0 %v1477
        %v1818 = vpop.f32.mrf.mxu0
        %v1819 = vadd.f32 0.0, %v1818
        %v1820 = vpop.f32.mrf.mxu0
        %v1821 = vadd.f32 0.0, %v1820
        %1822 = vmatmul.bf16.gmra.mxu0 %v1480
        %v1823 = vpop.f32.mrf.mxu0
        %v1824 = vadd.f32 0.0, %v1823
        %v1825 = vpop.f32.mrf.mxu0
        %v1826 = vadd.f32 0.0, %v1825
        %1827 = vmatmul.bf16.gmra.mxu0 %v1483
        %v1828 = vpop.f32.mrf.mxu0
        %v1829 = vadd.f32 0.0, %v1828
        %v1830 = vpop.f32.mrf.mxu0
        %v1831 = vadd.f32 0.0, %v1830
        %1832 = vmatmul.bf16.gmra.mxu0 %v1486
        %v1833 = vpop.f32.mrf.mxu0
        %v1834 = vadd.f32 0.0, %v1833
        %v1835 = vpop.f32.mrf.mxu0
        %v1836 = vadd.f32 0.0, %v1835
        %1837 = vmatmul.bf16.gmra.mxu0 %v1489
        %v1838 = vpop.f32.mrf.mxu0
        %v1839 = vadd.f32 0.0, %v1838
        %v1840 = vpop.f32.mrf.mxu0
        %v1841 = vadd.f32 0.0, %v1840
        %1842 = vmatmul.bf16.gmra.mxu0 %v1492
        %v1843 = vpop.f32.mrf.mxu0
        %v1844 = vadd.f32 0.0, %v1843
        %v1845 = vpop.f32.mrf.mxu0
        %v1846 = vadd.f32 0.0, %v1845
        %1847 = vmatmul.bf16.gmra.mxu0 %v1495
        %v1848 = vpop.f32.mrf.mxu0
        %v1849 = vadd.f32 0.0, %v1848
        %v1850 = vpop.f32.mrf.mxu0
        %v1851 = vadd.f32 0.0, %v1850
        %1852 = vmatmul.bf16.gmra.mxu0 %v1498
        %v1853 = vpop.f32.mrf.mxu0
        %v1854 = vadd.f32 0.0, %v1853
        %v1855 = vpop.f32.mrf.mxu0
        %v1856 = vadd.f32 0.0, %v1855
        %1857 = vmatmul.bf16.gmra.mxu0 %v1639
        %v1858 = vpop.f32.mrf.mxu0
        %v1859 = vadd.f32 0.0, %v1858
        %v1860 = vpop.f32.mrf.mxu0
        %v1861 = vadd.f32 0.0, %v1860
        %1862 = vmatmul.bf16.gmra.mxu0 %v1453
        %v1863 = vpop.f32.mrf.mxu0
        %v1864 = vadd.f32 0.0, %v1863
        %v1865 = vpop.f32.mrf.mxu0
        %v1866 = vadd.f32 0.0, %v1865
        %1867 = vdwg.mxu0
        %v1868 = vadd.f32 %v1730, %v1789
        %v1869 = vadd.f32 %v1731, %v1791
        %v1870 = vadd.f32 %v1732, %v1794
        %v1871 = vadd.f32 %v1733, %v1796
        %v1872 = vadd.f32 %v1734, %v1799
        %v1873 = vadd.f32 %v1735, %v1801
        %v1874 = vadd.f32 %v1736, %v1804
        %v1875 = vadd.f32 %v1737, %v1806
        %v1876 = vadd.f32 %v1738, %v1809
        %v1877 = vadd.f32 %v1739, %v1811
        %v1878 = vadd.f32 %v1740, %v1814
        %v1879 = vadd.f32 %v1741, %v1816
        %v1880 = vadd.f32 %v1742, %v1819
        %v1881 = vadd.f32 %v1743, %v1821
        %v1882 = vadd.f32 %v1744, %v1824
        %v1883 = vadd.f32 %v1745, %v1826
        %v1884 = vadd.f32 %v1746, %v1829
        %v1885 = vadd.f32 %v1747, %v1831
        %v1886 = vadd.f32 %v1748, %v1834
        %v1887 = vadd.f32 %v1749, %v1836
        %v1888 = vadd.f32 %v1750, %v1839
        %v1889 = vadd.f32 %v1751, %v1841
        %v1890 = vadd.f32 %v1752, %v1844
        %v1891 = vadd.f32 %v1753, %v1846
        %v1892 = vadd.f32 %v1754, %v1849
        %v1893 = vadd.f32 %v1755, %v1851
        %v1894 = vadd.f32 %v1756, %v1854
        %v1895 = vadd.f32 %v1757, %v1856
        %v1896 = vadd.f32 %v1758, %v1859
        %v1897 = vadd.f32 %v1759, %v1861
        %v1898 = vadd.f32 %v1760, %v1864
        %v1899 = vadd.f32 %v1761, %v1866
        %vm1933 = vcmask 1046528
        %v1934 = vrot.slane 0, 1
        %v1935 = vsel %vm1933, %v1934, %v1934
        %v1936 = vrot.slane %v818, 1
        %v1937 = vrot.slane %v834, 1
        %v1938 = vsel %vm1933, %v1936, %v1937
        %v1939 = vrot.slane %v819, 1
        %v1940 = vrot.slane %v835, 1
        %v1941 = vsel %vm1933, %v1939, %v1940
        %v1942 = vrot.slane %v820, 1
        %v1943 = vrot.slane %v836, 1
        %v1944 = vsel %vm1933, %v1942, %v1943
        %v1945 = vrot.slane %v821, 1
        %v1946 = vrot.slane %v837, 1
        %v1947 = vsel %vm1933, %v1945, %v1946
        %v1948 = vrot.slane %v822, 1
        %v1949 = vrot.slane %v838, 1
        %v1950 = vsel %vm1933, %v1948, %v1949
        %v1951 = vrot.slane %v823, 1
        %v1952 = vrot.slane %v839, 1
        %v1953 = vsel %vm1933, %v1951, %v1952
        %v1954 = vrot.slane %v824, 1
        %v1955 = vrot.slane %v840, 1
        %v1956 = vsel %vm1933, %v1954, %v1955
        %v1957 = vrot.slane %v825, 1
        %v1958 = vrot.slane %v841, 1
        %v1959 = vsel %vm1933, %v1957, %v1958
        %v1960 = vrot.slane %v826, 1
        %v1961 = vrot.slane %v842, 1
        %v1962 = vsel %vm1933, %v1960, %v1961
        %v1963 = vrot.slane %v827, 1
        %v1964 = vrot.slane %v843, 1
        %v1965 = vsel %vm1933, %v1963, %v1964
        %v1966 = vrot.slane %v828, 1
        %v1967 = vrot.slane %v844, 1
        %v1968 = vsel %vm1933, %v1966, %v1967
        %v1969 = vrot.slane %v829, 1
        %v1970 = vrot.slane %v845, 1
        %v1971 = vsel %vm1933, %v1969, %v1970
        %v1972 = vrot.slane %v830, 1
        %v1973 = vrot.slane %v846, 1
        %v1974 = vsel %vm1933, %v1972, %v1973
        %v1975 = vrot.slane %v831, 1
        %v1976 = vrot.slane %v847, 1
        %v1977 = vsel %vm1933, %v1975, %v1976
        %v1978 = vrot.slane %v832, 1
        %v1979 = vrot.slane %v848, 1
        %v1980 = vsel %vm1933, %v1978, %v1979
        %v1981 = vrot.slane %v833, 1
        %v1982 = vrot.slane %v849, 1
        %v1983 = vsel %vm1933, %v1981, %v1982
        %s1984 = scalar_lea.vmem %s3, 32
        %v1985 = vld [vmem:[%s1984] sm:$0xf]
        %v1986 = vld [vmem:[%s1984 + $0x4] sm:$0xf]
        %v1987 = vld [vmem:[%s1984 + $0x8] sm:$0xf]
        %v1988 = vld [vmem:[%s1984 + $0xc] sm:$0xf]
        %v1993 = vunpack.c.l.b16 %v1985
        %v1994 = vunpack.c.l.b16 %v1986
        %v1995 = vunpack.c.l.b16 %v1987
        %v1996 = vunpack.c.l.b16 %v1988
        %v1997 = vpack.c.b16 %v1994, %v1993
        %v1998 = vpack.c.b16 %v1996, %v1995
        %v2002 = vsel %vm871, %v1935, 0
        %v2005 = vsel %vm871, %v1938, 0
        %v2008 = vsel %vm871, %v1941, 0
        %v2011 = vsel %vm871, %v1944, 0
        %v2014 = vsel %vm871, %v1947, 0
        %v2017 = vsel %vm871, %v1950, 0
        %v2020 = vsel %vm871, %v1953, 0
        %v2023 = vsel %vm871, %v1956, 0
        %v2026 = vsel %vm871, %v1959, 0
        %v2029 = vsel %vm871, %v1962, 0
        %v2032 = vsel %vm871, %v1965, 0
        %v2035 = vsel %vm871, %v1968, 0
        %v2038 = vsel %vm871, %v1971, 0
        %v2041 = vsel %vm871, %v1974, 0
        %v2044 = vsel %vm871, %v1977, 0
        %v2047 = vsel %vm871, %v1980, 0
        %2049 = vmatpush.bf16.msra.mxu0 0
        %2050 = vmatpush.bf16.msra.mxu0 0
        %2051 = vmatpush.bf16.msra.mxu0 0
        %2052 = vmatpush.bf16.msra.mxu0 0
        %2053 = vmatpush.bf16.msra.mxu0 0
        %2054 = vmatpush.bf16.msra.mxu0 0
        %2055 = vmatpush.bf16.msra.mxu0 %v1998
        %2056 = vmatpush.bf16.msra.mxu0 %v1997
        %2057 = vmatmul.bf16.gmra.mxu0 %v2002
        %v2058 = vpop.f32.mrf.mxu0
        %v2059 = vadd.f32 0.0, %v2058
        %v2060 = vpop.f32.mrf.mxu0
        %v2061 = vadd.f32 0.0, %v2060
        %2062 = vmatmul.bf16.gmra.mxu0 %v2005
        %v2063 = vpop.f32.mrf.mxu0
        %v2064 = vadd.f32 0.0, %v2063
        %v2065 = vpop.f32.mrf.mxu0
        %v2066 = vadd.f32 0.0, %v2065
        %2067 = vmatmul.bf16.gmra.mxu0 %v2008
        %v2068 = vpop.f32.mrf.mxu0
        %v2069 = vadd.f32 0.0, %v2068
        %v2070 = vpop.f32.mrf.mxu0
        %v2071 = vadd.f32 0.0, %v2070
        %2072 = vmatmul.bf16.gmra.mxu0 %v2011
        %v2073 = vpop.f32.mrf.mxu0
        %v2074 = vadd.f32 0.0, %v2073
        %v2075 = vpop.f32.mrf.mxu0
        %v2076 = vadd.f32 0.0, %v2075
        %2077 = vmatmul.bf16.gmra.mxu0 %v2014
        %v2078 = vpop.f32.mrf.mxu0
        %v2079 = vadd.f32 0.0, %v2078
        %v2080 = vpop.f32.mrf.mxu0
        %v2081 = vadd.f32 0.0, %v2080
        %2082 = vmatmul.bf16.gmra.mxu0 %v2017
        %v2083 = vpop.f32.mrf.mxu0
        %v2084 = vadd.f32 0.0, %v2083
        %v2085 = vpop.f32.mrf.mxu0
        %v2086 = vadd.f32 0.0, %v2085
        %2087 = vmatmul.bf16.gmra.mxu0 %v2020
        %v2088 = vpop.f32.mrf.mxu0
        %v2089 = vadd.f32 0.0, %v2088
        %v2090 = vpop.f32.mrf.mxu0
        %v2091 = vadd.f32 0.0, %v2090
        %2092 = vmatmul.bf16.gmra.mxu0 %v2023
        %v2093 = vpop.f32.mrf.mxu0
        %v2094 = vadd.f32 0.0, %v2093
        %v2095 = vpop.f32.mrf.mxu0
        %v2096 = vadd.f32 0.0, %v2095
        %2097 = vmatmul.bf16.gmra.mxu0 %v2026
        %v2098 = vpop.f32.mrf.mxu0
        %v2099 = vadd.f32 0.0, %v2098
        %v2100 = vpop.f32.mrf.mxu0
        %v2101 = vadd.f32 0.0, %v2100
        %2102 = vmatmul.bf16.gmra.mxu0 %v2029
        %v2103 = vpop.f32.mrf.mxu0
        %v2104 = vadd.f32 0.0, %v2103
        %v2105 = vpop.f32.mrf.mxu0
        %v2106 = vadd.f32 0.0, %v2105
        %2107 = vmatmul.bf16.gmra.mxu0 %v2032
        %v2108 = vpop.f32.mrf.mxu0
        %v2109 = vadd.f32 0.0, %v2108
        %v2110 = vpop.f32.mrf.mxu0
        %v2111 = vadd.f32 0.0, %v2110
        %2112 = vmatmul.bf16.gmra.mxu0 %v2035
        %v2113 = vpop.f32.mrf.mxu0
        %v2114 = vadd.f32 0.0, %v2113
        %v2115 = vpop.f32.mrf.mxu0
        %v2116 = vadd.f32 0.0, %v2115
        %2117 = vmatmul.bf16.gmra.mxu0 %v2038
        %v2118 = vpop.f32.mrf.mxu0
        %v2119 = vadd.f32 0.0, %v2118
        %v2120 = vpop.f32.mrf.mxu0
        %v2121 = vadd.f32 0.0, %v2120
        %2122 = vmatmul.bf16.gmra.mxu0 %v2041
        %v2123 = vpop.f32.mrf.mxu0
        %v2124 = vadd.f32 0.0, %v2123
        %v2125 = vpop.f32.mrf.mxu0
        %v2126 = vadd.f32 0.0, %v2125
        %2127 = vmatmul.bf16.gmra.mxu0 %v2044
        %v2128 = vpop.f32.mrf.mxu0
        %v2129 = vadd.f32 0.0, %v2128
        %v2130 = vpop.f32.mrf.mxu0
        %v2131 = vadd.f32 0.0, %v2130
        %2132 = vmatmul.bf16.gmra.mxu0 %v2047
        %v2133 = vpop.f32.mrf.mxu0
        %v2134 = vadd.f32 0.0, %v2133
        %v2135 = vpop.f32.mrf.mxu0
        %v2136 = vadd.f32 0.0, %v2135
        %2137 = vdwg.mxu0
        %v2138 = vadd.f32 %v1868, %v2059
        %v2139 = vadd.f32 %v1869, %v2061
        %v2140 = vadd.f32 %v1870, %v2064
        %v2141 = vadd.f32 %v1871, %v2066
        %v2142 = vadd.f32 %v1872, %v2069
        %v2143 = vadd.f32 %v1873, %v2071
        %v2144 = vadd.f32 %v1874, %v2074
        %v2145 = vadd.f32 %v1875, %v2076
        %v2146 = vadd.f32 %v1876, %v2079
        %v2147 = vadd.f32 %v1877, %v2081
        %v2148 = vadd.f32 %v1878, %v2084
        %v2149 = vadd.f32 %v1879, %v2086
        %v2150 = vadd.f32 %v1880, %v2089
        %v2151 = vadd.f32 %v1881, %v2091
        %v2152 = vadd.f32 %v1882, %v2094
        %v2153 = vadd.f32 %v1883, %v2096
        %v2154 = vadd.f32 %v1884, %v2099
        %v2155 = vadd.f32 %v1885, %v2101
        %v2156 = vadd.f32 %v1886, %v2104
        %v2157 = vadd.f32 %v1887, %v2106
        %v2158 = vadd.f32 %v1888, %v2109
        %v2159 = vadd.f32 %v1889, %v2111
        %v2160 = vadd.f32 %v1890, %v2114
        %v2161 = vadd.f32 %v1891, %v2116
        %v2162 = vadd.f32 %v1892, %v2119
        %v2163 = vadd.f32 %v1893, %v2121
        %v2164 = vadd.f32 %v1894, %v2124
        %v2165 = vadd.f32 %v1895, %v2126
        %v2166 = vadd.f32 %v1896, %v2129
        %v2167 = vadd.f32 %v1897, %v2131
        %v2168 = vadd.f32 %v1898, %v2134
        %v2169 = vadd.f32 %v1899, %v2136
        %s2170 = scalar_lea.vmem %s3, 80
        %v2171 = vld [vmem:[%s2170] sm:$0xf]
        %v2172 = vld [vmem:[%s2170 + $0x4] sm:$0xf]
        %v2173 = vld [vmem:[%s2170 + $0x8] sm:$0xf]
        %v2174 = vld [vmem:[%s2170 + $0xc] sm:$0xf]
        %v2179 = vunpack.c.l.b16 %v2171
        %v2180 = vunpack.c.l.b16 %v2172
        %v2181 = vunpack.c.l.b16 %v2173
        %v2182 = vunpack.c.l.b16 %v2174
        %v2183 = vpack.c.b16 %v2180, %v2179
        %v2184 = vpack.c.b16 %v2182, %v2181
        %v2188 = vsel %vm871, %v1983, 0
        %2190 = vmatpush.bf16.msra.mxu0 0
        %2191 = vmatpush.bf16.msra.mxu0 0
        %2192 = vmatpush.bf16.msra.mxu0 0
        %2193 = vmatpush.bf16.msra.mxu0 0
        %2194 = vmatpush.bf16.msra.mxu0 0
        %2195 = vmatpush.bf16.msra.mxu0 0
        %2196 = vmatpush.bf16.msra.mxu0 %v2184
        %2197 = vmatpush.bf16.msra.mxu0 %v2183
        %2198 = vmatmul.bf16.gmra.mxu0 %v2005
        %v2199 = vpop.f32.mrf.mxu0
        %v2200 = vadd.f32 0.0, %v2199
        %v2201 = vpop.f32.mrf.mxu0
        %v2202 = vadd.f32 0.0, %v2201
        %2203 = vmatmul.bf16.gmra.mxu0 %v2008
        %v2204 = vpop.f32.mrf.mxu0
        %v2205 = vadd.f32 0.0, %v2204
        %v2206 = vpop.f32.mrf.mxu0
        %v2207 = vadd.f32 0.0, %v2206
        %2208 = vmatmul.bf16.gmra.mxu0 %v2011
        %v2209 = vpop.f32.mrf.mxu0
        %v2210 = vadd.f32 0.0, %v2209
        %v2211 = vpop.f32.mrf.mxu0
        %v2212 = vadd.f32 0.0, %v2211
        %2213 = vmatmul.bf16.gmra.mxu0 %v2014
        %v2214 = vpop.f32.mrf.mxu0
        %v2215 = vadd.f32 0.0, %v2214
        %v2216 = vpop.f32.mrf.mxu0
        %v2217 = vadd.f32 0.0, %v2216
        %2218 = vmatmul.bf16.gmra.mxu0 %v2017
        %v2219 = vpop.f32.mrf.mxu0
        %v2220 = vadd.f32 0.0, %v2219
        %v2221 = vpop.f32.mrf.mxu0
        %v2222 = vadd.f32 0.0, %v2221
        %2223 = vmatmul.bf16.gmra.mxu0 %v2020
        %v2224 = vpop.f32.mrf.mxu0
        %v2225 = vadd.f32 0.0, %v2224
        %v2226 = vpop.f32.mrf.mxu0
        %v2227 = vadd.f32 0.0, %v2226
        %2228 = vmatmul.bf16.gmra.mxu0 %v2023
        %v2229 = vpop.f32.mrf.mxu0
        %v2230 = vadd.f32 0.0, %v2229
        %v2231 = vpop.f32.mrf.mxu0
        %v2232 = vadd.f32 0.0, %v2231
        %2233 = vmatmul.bf16.gmra.mxu0 %v2026
        %v2234 = vpop.f32.mrf.mxu0
        %v2235 = vadd.f32 0.0, %v2234
        %v2236 = vpop.f32.mrf.mxu0
        %v2237 = vadd.f32 0.0, %v2236
        %2238 = vmatmul.bf16.gmra.mxu0 %v2029
        %v2239 = vpop.f32.mrf.mxu0
        %v2240 = vadd.f32 0.0, %v2239
        %v2241 = vpop.f32.mrf.mxu0
        %v2242 = vadd.f32 0.0, %v2241
        %2243 = vmatmul.bf16.gmra.mxu0 %v2032
        %v2244 = vpop.f32.mrf.mxu0
        %v2245 = vadd.f32 0.0, %v2244
        %v2246 = vpop.f32.mrf.mxu0
        %v2247 = vadd.f32 0.0, %v2246
        %2248 = vmatmul.bf16.gmra.mxu0 %v2035
        %v2249 = vpop.f32.mrf.mxu0
        %v2250 = vadd.f32 0.0, %v2249
        %v2251 = vpop.f32.mrf.mxu0
        %v2252 = vadd.f32 0.0, %v2251
        %2253 = vmatmul.bf16.gmra.mxu0 %v2038
        %v2254 = vpop.f32.mrf.mxu0
        %v2255 = vadd.f32 0.0, %v2254
        %v2256 = vpop.f32.mrf.mxu0
        %v2257 = vadd.f32 0.0, %v2256
        %2258 = vmatmul.bf16.gmra.mxu0 %v2041
        %v2259 = vpop.f32.mrf.mxu0
        %v2260 = vadd.f32 0.0, %v2259
        %v2261 = vpop.f32.mrf.mxu0
        %v2262 = vadd.f32 0.0, %v2261
        %2263 = vmatmul.bf16.gmra.mxu0 %v2044
        %v2264 = vpop.f32.mrf.mxu0
        %v2265 = vadd.f32 0.0, %v2264
        %v2266 = vpop.f32.mrf.mxu0
        %v2267 = vadd.f32 0.0, %v2266
        %2268 = vmatmul.bf16.gmra.mxu0 %v2047
        %v2269 = vpop.f32.mrf.mxu0
        %v2270 = vadd.f32 0.0, %v2269
        %v2271 = vpop.f32.mrf.mxu0
        %v2272 = vadd.f32 0.0, %v2271
        %2273 = vmatmul.bf16.gmra.mxu0 %v2188
        %v2274 = vpop.f32.mrf.mxu0
        %v2275 = vadd.f32 0.0, %v2274
        %v2276 = vpop.f32.mrf.mxu0
        %v2277 = vadd.f32 0.0, %v2276
        %2278 = vdwg.mxu0
        %v2279 = vadd.f32 %v2138, %v2200
        %v2280 = vadd.f32 %v2139, %v2202
        %v2281 = vadd.f32 %v2140, %v2205
        %v2282 = vadd.f32 %v2141, %v2207
        %v2283 = vadd.f32 %v2142, %v2210
        %v2284 = vadd.f32 %v2143, %v2212
        %v2285 = vadd.f32 %v2144, %v2215
        %v2286 = vadd.f32 %v2145, %v2217
        %v2287 = vadd.f32 %v2146, %v2220
        %v2288 = vadd.f32 %v2147, %v2222
        %v2289 = vadd.f32 %v2148, %v2225
        %v2290 = vadd.f32 %v2149, %v2227
        %v2291 = vadd.f32 %v2150, %v2230
        %v2292 = vadd.f32 %v2151, %v2232
        %v2293 = vadd.f32 %v2152, %v2235
        %v2294 = vadd.f32 %v2153, %v2237
        %v2295 = vadd.f32 %v2154, %v2240
        %v2296 = vadd.f32 %v2155, %v2242
        %v2297 = vadd.f32 %v2156, %v2245
        %v2298 = vadd.f32 %v2157, %v2247
        %v2299 = vadd.f32 %v2158, %v2250
        %v2300 = vadd.f32 %v2159, %v2252
        %v2301 = vadd.f32 %v2160, %v2255
        %v2302 = vadd.f32 %v2161, %v2257
        %v2303 = vadd.f32 %v2162, %v2260
        %v2304 = vadd.f32 %v2163, %v2262
        %v2305 = vadd.f32 %v2164, %v2265
        %v2306 = vadd.f32 %v2165, %v2267
        %v2307 = vadd.f32 %v2166, %v2270
        %v2308 = vadd.f32 %v2167, %v2272
        %v2309 = vadd.f32 %v2168, %v2275
        %v2310 = vadd.f32 %v2169, %v2277
        %s2311 = scalar_lea.vmem %s3, 128
        %v2312 = vld [vmem:[%s2311] sm:$0xf]
        %v2313 = vld [vmem:[%s2311 + $0x4] sm:$0xf]
        %v2314 = vld [vmem:[%s2311 + $0x8] sm:$0xf]
        %v2315 = vld [vmem:[%s2311 + $0xc] sm:$0xf]
        %v2320 = vunpack.c.l.b16 %v2312
        %v2321 = vunpack.c.l.b16 %v2313
        %v2322 = vunpack.c.l.b16 %v2314
        %v2323 = vunpack.c.l.b16 %v2315
        %v2324 = vpack.c.b16 %v2321, %v2320
        %v2325 = vpack.c.b16 %v2323, %v2322
        %2328 = vmatpush.bf16.msra.mxu0 0
        %2329 = vmatpush.bf16.msra.mxu0 0
        %2330 = vmatpush.bf16.msra.mxu0 0
        %2331 = vmatpush.bf16.msra.mxu0 0
        %2332 = vmatpush.bf16.msra.mxu0 0
        %2333 = vmatpush.bf16.msra.mxu0 0
        %2334 = vmatpush.bf16.msra.mxu0 %v2325
        %2335 = vmatpush.bf16.msra.mxu0 %v2324
        %2336 = vmatmul.bf16.gmra.mxu0 %v2008
        %v2337 = vpop.f32.mrf.mxu0
        %v2338 = vadd.f32 0.0, %v2337
        %v2339 = vpop.f32.mrf.mxu0
        %v2340 = vadd.f32 0.0, %v2339
        %2341 = vmatmul.bf16.gmra.mxu0 %v2011
        %v2342 = vpop.f32.mrf.mxu0
        %v2343 = vadd.f32 0.0, %v2342
        %v2344 = vpop.f32.mrf.mxu0
        %v2345 = vadd.f32 0.0, %v2344
        %2346 = vmatmul.bf16.gmra.mxu0 %v2014
        %v2347 = vpop.f32.mrf.mxu0
        %v2348 = vadd.f32 0.0, %v2347
        %v2349 = vpop.f32.mrf.mxu0
        %v2350 = vadd.f32 0.0, %v2349
        %2351 = vmatmul.bf16.gmra.mxu0 %v2017
        %v2352 = vpop.f32.mrf.mxu0
        %v2353 = vadd.f32 0.0, %v2352
        %v2354 = vpop.f32.mrf.mxu0
        %v2355 = vadd.f32 0.0, %v2354
        %2356 = vmatmul.bf16.gmra.mxu0 %v2020
        %v2357 = vpop.f32.mrf.mxu0
        %v2358 = vadd.f32 0.0, %v2357
        %v2359 = vpop.f32.mrf.mxu0
        %v2360 = vadd.f32 0.0, %v2359
        %2361 = vmatmul.bf16.gmra.mxu0 %v2023
        %v2362 = vpop.f32.mrf.mxu0
        %v2363 = vadd.f32 0.0, %v2362
        %v2364 = vpop.f32.mrf.mxu0
        %v2365 = vadd.f32 0.0, %v2364
        %2366 = vmatmul.bf16.gmra.mxu0 %v2026
        %v2367 = vpop.f32.mrf.mxu0
        %v2368 = vadd.f32 0.0, %v2367
        %v2369 = vpop.f32.mrf.mxu0
        %v2370 = vadd.f32 0.0, %v2369
        %2371 = vmatmul.bf16.gmra.mxu0 %v2029
        %v2372 = vpop.f32.mrf.mxu0
        %v2373 = vadd.f32 0.0, %v2372
        %v2374 = vpop.f32.mrf.mxu0
        %v2375 = vadd.f32 0.0, %v2374
        %2376 = vmatmul.bf16.gmra.mxu0 %v2032
        %v2377 = vpop.f32.mrf.mxu0
        %v2378 = vadd.f32 0.0, %v2377
        %v2379 = vpop.f32.mrf.mxu0
        %v2380 = vadd.f32 0.0, %v2379
        %2381 = vmatmul.bf16.gmra.mxu0 %v2035
        %v2382 = vpop.f32.mrf.mxu0
        %v2383 = vadd.f32 0.0, %v2382
        %v2384 = vpop.f32.mrf.mxu0
        %v2385 = vadd.f32 0.0, %v2384
        %2386 = vmatmul.bf16.gmra.mxu0 %v2038
        %v2387 = vpop.f32.mrf.mxu0
        %v2388 = vadd.f32 0.0, %v2387
        %v2389 = vpop.f32.mrf.mxu0
        %v2390 = vadd.f32 0.0, %v2389
        %2391 = vmatmul.bf16.gmra.mxu0 %v2041
        %v2392 = vpop.f32.mrf.mxu0
        %v2393 = vadd.f32 0.0, %v2392
        %v2394 = vpop.f32.mrf.mxu0
        %v2395 = vadd.f32 0.0, %v2394
        %2396 = vmatmul.bf16.gmra.mxu0 %v2044
        %v2397 = vpop.f32.mrf.mxu0
        %v2398 = vadd.f32 0.0, %v2397
        %v2399 = vpop.f32.mrf.mxu0
        %v2400 = vadd.f32 0.0, %v2399
        %2401 = vmatmul.bf16.gmra.mxu0 %v2047
        %v2402 = vpop.f32.mrf.mxu0
        %v2403 = vadd.f32 0.0, %v2402
        %v2404 = vpop.f32.mrf.mxu0
        %v2405 = vadd.f32 0.0, %v2404
        %2406 = vmatmul.bf16.gmra.mxu0 %v2188
        %v2407 = vpop.f32.mrf.mxu0
        %v2408 = vadd.f32 0.0, %v2407
        %v2409 = vpop.f32.mrf.mxu0
        %v2410 = vadd.f32 0.0, %v2409
        %2411 = vmatmul.bf16.gmra.mxu0 %v2002
        %v2412 = vpop.f32.mrf.mxu0
        %v2413 = vadd.f32 0.0, %v2412
        %v2414 = vpop.f32.mrf.mxu0
        %v2415 = vadd.f32 0.0, %v2414
        %2416 = vdwg.mxu0
        %v2417 = vadd.f32 %v2279, %v2338
        %v2418 = vadd.f32 %v2280, %v2340
        %v2419 = vadd.f32 %v2281, %v2343
        %v2420 = vadd.f32 %v2282, %v2345
        %v2421 = vadd.f32 %v2283, %v2348
        %v2422 = vadd.f32 %v2284, %v2350
        %v2423 = vadd.f32 %v2285, %v2353
        %v2424 = vadd.f32 %v2286, %v2355
        %v2425 = vadd.f32 %v2287, %v2358
        %v2426 = vadd.f32 %v2288, %v2360
        %v2427 = vadd.f32 %v2289, %v2363
        %v2428 = vadd.f32 %v2290, %v2365
        %v2429 = vadd.f32 %v2291, %v2368
        %v2430 = vadd.f32 %v2292, %v2370
        %v2431 = vadd.f32 %v2293, %v2373
        %v2432 = vadd.f32 %v2294, %v2375
        %v2433 = vadd.f32 %v2295, %v2378
        %v2434 = vadd.f32 %v2296, %v2380
        %v2435 = vadd.f32 %v2297, %v2383
        %v2436 = vadd.f32 %v2298, %v2385
        %v2437 = vadd.f32 %v2299, %v2388
        %v2438 = vadd.f32 %v2300, %v2390
        %v2439 = vadd.f32 %v2301, %v2393
        %v2440 = vadd.f32 %v2302, %v2395
        %v2441 = vadd.f32 %v2303, %v2398
        %v2442 = vadd.f32 %v2304, %v2400
        %v2443 = vadd.f32 %v2305, %v2403
        %v2444 = vadd.f32 %v2306, %v2405
        %v2445 = vadd.f32 %v2307, %v2408
        %v2446 = vadd.f32 %v2308, %v2410
        %v2447 = vadd.f32 %v2309, %v2413
        %v2448 = vadd.f32 %v2310, %v2415
        %v2449 = vld [vmem:[%s4] sm:$0x1]
        %v2451 = vperm.slane %v2449, 0
        %v2453 = vadd.f32 %v2417, %v2451
        %v2454 = vadd.f32 %v2418, %v2451
        %v2455 = vadd.f32 %v2419, %v2451
        %v2456 = vadd.f32 %v2420, %v2451
        %v2457 = vadd.f32 %v2421, %v2451
        %v2458 = vadd.f32 %v2422, %v2451
        %v2459 = vadd.f32 %v2423, %v2451
        %v2460 = vadd.f32 %v2424, %v2451
        %v2461 = vadd.f32 %v2425, %v2451
        %v2462 = vadd.f32 %v2426, %v2451
        %v2463 = vadd.f32 %v2427, %v2451
        %v2464 = vadd.f32 %v2428, %v2451
        %v2465 = vadd.f32 %v2429, %v2451
        %v2466 = vadd.f32 %v2430, %v2451
        %v2467 = vadd.f32 %v2431, %v2451
        %v2468 = vadd.f32 %v2432, %v2451
        %v2469 = vadd.f32 %v2433, %v2451
        %v2470 = vadd.f32 %v2434, %v2451
        %v2471 = vadd.f32 %v2435, %v2451
        %v2472 = vadd.f32 %v2436, %v2451
        %v2473 = vadd.f32 %v2437, %v2451
        %v2474 = vadd.f32 %v2438, %v2451
        %v2475 = vadd.f32 %v2439, %v2451
        %v2476 = vadd.f32 %v2440, %v2451
        %v2477 = vadd.f32 %v2441, %v2451
        %v2478 = vadd.f32 %v2442, %v2451
        %v2479 = vadd.f32 %v2443, %v2451
        %v2480 = vadd.f32 %v2444, %v2451
        %v2481 = vadd.f32 %v2445, %v2451
        %v2482 = vadd.f32 %v2446, %v2451
        %v2483 = vadd.f32 %v2447, %v2451
        %v2484 = vadd.f32 %v2448, %v2451
        %v2485 = vmax.f32 %v2453, 0.0
        %v2486 = vmax.f32 %v2454, 0.0
        %v2487 = vmax.f32 %v2455, 0.0
        %v2488 = vmax.f32 %v2456, 0.0
        %v2489 = vmax.f32 %v2457, 0.0
        %v2490 = vmax.f32 %v2458, 0.0
        %v2491 = vmax.f32 %v2459, 0.0
        %v2492 = vmax.f32 %v2460, 0.0
        %v2493 = vmax.f32 %v2461, 0.0
        %v2494 = vmax.f32 %v2462, 0.0
        %v2495 = vmax.f32 %v2463, 0.0
        %v2496 = vmax.f32 %v2464, 0.0
        %v2497 = vmax.f32 %v2465, 0.0
        %v2498 = vmax.f32 %v2466, 0.0
        %v2499 = vmax.f32 %v2467, 0.0
        %v2500 = vmax.f32 %v2468, 0.0
        %v2501 = vmax.f32 %v2469, 0.0
        %v2502 = vmax.f32 %v2470, 0.0
        %v2503 = vmax.f32 %v2471, 0.0
        %v2504 = vmax.f32 %v2472, 0.0
        %v2505 = vmax.f32 %v2473, 0.0
        %v2506 = vmax.f32 %v2474, 0.0
        %v2507 = vmax.f32 %v2475, 0.0
        %v2508 = vmax.f32 %v2476, 0.0
        %v2509 = vmax.f32 %v2477, 0.0
        %v2510 = vmax.f32 %v2478, 0.0
        %v2511 = vmax.f32 %v2479, 0.0
        %v2512 = vmax.f32 %v2480, 0.0
        %v2513 = vmax.f32 %v2481, 0.0
        %v2514 = vmax.f32 %v2482, 0.0
        %v2515 = vmax.f32 %v2483, 0.0
        %v2516 = vmax.f32 %v2484, 0.0
        %v2517 = vpack.c.bf16 %v2486, %v2485
        %v2518 = vpack.c.bf16 %v2488, %v2487
        %v2519 = vpack.c.bf16 %v2490, %v2489
        %v2520 = vpack.c.bf16 %v2492, %v2491
        %v2521 = vpack.c.bf16 %v2494, %v2493
        %v2522 = vpack.c.bf16 %v2496, %v2495
        %v2523 = vpack.c.bf16 %v2498, %v2497
        %v2524 = vpack.c.bf16 %v2500, %v2499
        %v2525 = vpack.c.bf16 %v2502, %v2501
        %v2526 = vpack.c.bf16 %v2504, %v2503
        %v2527 = vpack.c.bf16 %v2506, %v2505
        %v2528 = vpack.c.bf16 %v2508, %v2507
        %v2529 = vpack.c.bf16 %v2510, %v2509
        %v2530 = vpack.c.bf16 %v2512, %v2511
        %v2531 = vpack.c.bf16 %v2514, %v2513
        %v2532 = vpack.c.bf16 %v2516, %v2515
        %v2533 = vld [vmem:[%s5] sm:$0xf]
        %v2534 = vld [vmem:[%s5 + $0x4] sm:$0xf]
        %v2535 = vld [vmem:[%s5 + $0x8] sm:$0xf]
        %v2536 = vld [vmem:[%s5 + $0xc] sm:$0xf]
        %v2537 = vld [vmem:[%s6] sm:$0x1]
        %v2539 = vperm.slane %v2537, 0
        %v2545 = vunpack.c.l.b16 %v2533
        %v2546 = vunpack.c.l.b16 %v2534
        %v2547 = vunpack.c.l.b16 %v2535
        %v2548 = vunpack.c.l.b16 %v2536
        %v2549 = vpack.c.b16 %v2546, %v2545
        %v2550 = vpack.c.b16 %v2548, %v2547
        %v2554 = vsel %vm871, %v2517, 0
        %v2557 = vsel %vm871, %v2518, 0
        %v2560 = vsel %vm871, %v2519, 0
        %v2563 = vsel %vm871, %v2520, 0
        %v2566 = vsel %vm871, %v2521, 0
        %v2569 = vsel %vm871, %v2522, 0
        %v2572 = vsel %vm871, %v2523, 0
        %v2575 = vsel %vm871, %v2524, 0
        %v2578 = vsel %vm871, %v2525, 0
        %v2581 = vsel %vm871, %v2526, 0
        %v2584 = vsel %vm871, %v2527, 0
        %v2587 = vsel %vm871, %v2528, 0
        %v2590 = vsel %vm871, %v2529, 0
        %v2593 = vsel %vm871, %v2530, 0
        %v2596 = vsel %vm871, %v2531, 0
        %v2599 = vsel %vm871, %v2532, 0
        %2601 = vmatpush.bf16.msra.mxu0 0
        %2602 = vmatpush.bf16.msra.mxu0 0
        %2603 = vmatpush.bf16.msra.mxu0 0
        %2604 = vmatpush.bf16.msra.mxu0 0
        %2605 = vmatpush.bf16.msra.mxu0 0
        %2606 = vmatpush.bf16.msra.mxu0 0
        %2607 = vmatpush.bf16.msra.mxu0 %v2550
        %2608 = vmatpush.bf16.msra.mxu0 %v2549
        %2609 = vmatmul.bf16.gmra.mxu0 %v2554
        %v2610 = vpop.f32.mrf.mxu0
        %v2611 = vadd.f32 %v2539, %v2610
        %v2612 = vpop.f32.mrf.mxu0
        %v2613 = vadd.f32 %v2539, %v2612
        %2614 = vmatmul.bf16.gmra.mxu0 %v2557
        %v2615 = vpop.f32.mrf.mxu0
        %v2616 = vadd.f32 %v2539, %v2615
        %v2617 = vpop.f32.mrf.mxu0
        %v2618 = vadd.f32 %v2539, %v2617
        %2619 = vmatmul.bf16.gmra.mxu0 %v2560
        %v2620 = vpop.f32.mrf.mxu0
        %v2621 = vadd.f32 %v2539, %v2620
        %v2622 = vpop.f32.mrf.mxu0
        %v2623 = vadd.f32 %v2539, %v2622
        %2624 = vmatmul.bf16.gmra.mxu0 %v2563
        %v2625 = vpop.f32.mrf.mxu0
        %v2626 = vadd.f32 %v2539, %v2625
        %v2627 = vpop.f32.mrf.mxu0
        %v2628 = vadd.f32 %v2539, %v2627
        %2629 = vmatmul.bf16.gmra.mxu0 %v2566
        %v2630 = vpop.f32.mrf.mxu0
        %v2631 = vadd.f32 %v2539, %v2630
        %v2632 = vpop.f32.mrf.mxu0
        %v2633 = vadd.f32 %v2539, %v2632
        %2634 = vmatmul.bf16.gmra.mxu0 %v2569
        %v2635 = vpop.f32.mrf.mxu0
        %v2636 = vadd.f32 %v2539, %v2635
        %v2637 = vpop.f32.mrf.mxu0
        %v2638 = vadd.f32 %v2539, %v2637
        %2639 = vmatmul.bf16.gmra.mxu0 %v2572
        %v2640 = vpop.f32.mrf.mxu0
        %v2641 = vadd.f32 %v2539, %v2640
        %v2642 = vpop.f32.mrf.mxu0
        %v2643 = vadd.f32 %v2539, %v2642
        %2644 = vmatmul.bf16.gmra.mxu0 %v2575
        %v2645 = vpop.f32.mrf.mxu0
        %v2646 = vadd.f32 %v2539, %v2645
        %v2647 = vpop.f32.mrf.mxu0
        %v2648 = vadd.f32 %v2539, %v2647
        %2649 = vmatmul.bf16.gmra.mxu0 %v2578
        %v2650 = vpop.f32.mrf.mxu0
        %v2651 = vadd.f32 %v2539, %v2650
        %v2652 = vpop.f32.mrf.mxu0
        %v2653 = vadd.f32 %v2539, %v2652
        %2654 = vmatmul.bf16.gmra.mxu0 %v2581
        %v2655 = vpop.f32.mrf.mxu0
        %v2656 = vadd.f32 %v2539, %v2655
        %v2657 = vpop.f32.mrf.mxu0
        %v2658 = vadd.f32 %v2539, %v2657
        %2659 = vmatmul.bf16.gmra.mxu0 %v2584
        %v2660 = vpop.f32.mrf.mxu0
        %v2661 = vadd.f32 %v2539, %v2660
        %v2662 = vpop.f32.mrf.mxu0
        %v2663 = vadd.f32 %v2539, %v2662
        %2664 = vmatmul.bf16.gmra.mxu0 %v2587
        %v2665 = vpop.f32.mrf.mxu0
        %v2666 = vadd.f32 %v2539, %v2665
        %v2667 = vpop.f32.mrf.mxu0
        %v2668 = vadd.f32 %v2539, %v2667
        %2669 = vmatmul.bf16.gmra.mxu0 %v2590
        %v2670 = vpop.f32.mrf.mxu0
        %v2671 = vadd.f32 %v2539, %v2670
        %v2672 = vpop.f32.mrf.mxu0
        %v2673 = vadd.f32 %v2539, %v2672
        %2674 = vmatmul.bf16.gmra.mxu0 %v2593
        %v2675 = vpop.f32.mrf.mxu0
        %v2676 = vadd.f32 %v2539, %v2675
        %v2677 = vpop.f32.mrf.mxu0
        %v2678 = vadd.f32 %v2539, %v2677
        %2679 = vmatmul.bf16.gmra.mxu0 %v2596
        %v2680 = vpop.f32.mrf.mxu0
        %v2681 = vadd.f32 %v2539, %v2680
        %v2682 = vpop.f32.mrf.mxu0
        %v2683 = vadd.f32 %v2539, %v2682
        %2684 = vmatmul.bf16.gmra.mxu0 %v2599
        %v2685 = vpop.f32.mrf.mxu0
        %v2686 = vadd.f32 %v2539, %v2685
        %v2687 = vpop.f32.mrf.mxu0
        %v2688 = vadd.f32 %v2539, %v2687
        %2689 = vdwg.mxu0
        %v2690 = vld [vmem:[%s7] sm:$0xf]
        %v2691 = vld [vmem:[%s7 + $0x4] sm:$0xf]
        %v2692 = vld [vmem:[%s7 + $0x8] sm:$0xf]
        %v2693 = vld [vmem:[%s7 + $0xc] sm:$0xf]
        %v2694 = vld [vmem:[%s7 + $0x10] sm:$0xf]
        %v2695 = vld [vmem:[%s7 + $0x14] sm:$0xf]
        %v2696 = vld [vmem:[%s7 + $0x18] sm:$0xf]
        %v2697 = vld [vmem:[%s7 + $0x1c] sm:$0xf]
        %v2706 = vunpack.c.l.b16 %v2690
        %v2707 = vunpack.c.l.b16 %v2691
        %v2708 = vunpack.c.l.b16 %v2692
        %v2709 = vunpack.c.l.b16 %v2693
        %v2710 = vunpack.c.l.b16 %v2694
        %v2711 = vunpack.c.l.b16 %v2695
        %v2712 = vunpack.c.l.b16 %v2696
        %v2713 = vunpack.c.l.b16 %v2697
        %v2714 = vpack.c.b16 %v2707, %v2706
        %v2715 = vpack.c.b16 %v2709, %v2708
        %v2716 = vpack.c.b16 %v2711, %v2710
        %v2717 = vpack.c.b16 %v2713, %v2712
        %2722 = vmatpush.bf16.msra.mxu0 0
        %2723 = vmatpush.bf16.msra.mxu0 0
        %2724 = vmatpush.bf16.msra.mxu0 0
        %2725 = vmatpush.bf16.msra.mxu0 0
        %2726 = vmatpush.bf16.msra.mxu0 %v2717
        %2727 = vmatpush.bf16.msra.mxu0 %v2716
        %2728 = vmatpush.bf16.msra.mxu0 %v2715
        %2729 = vmatpush.bf16.msra.mxu0 %v2714
        %2730 = vmatmul.bf16.gmra.mxu0 %v391
        %v2731 = vpop.f32.mrf.mxu0
        %v2732 = vadd.f32 0.0, %v2731
        %v2733 = vpop.f32.mrf.mxu0
        %v2734 = vadd.f32 0.0, %v2733
        %2735 = vmatmul.bf16.gmra.mxu0 %v394
        %v2736 = vpop.f32.mrf.mxu0
        %v2737 = vadd.f32 0.0, %v2736
        %v2738 = vpop.f32.mrf.mxu0
        %v2739 = vadd.f32 0.0, %v2738
        %2740 = vmatmul.bf16.gmra.mxu0 %v397
        %v2741 = vpop.f32.mrf.mxu0
        %v2742 = vadd.f32 0.0, %v2741
        %v2743 = vpop.f32.mrf.mxu0
        %v2744 = vadd.f32 0.0, %v2743
        %2745 = vmatmul.bf16.gmra.mxu0 %v400
        %v2746 = vpop.f32.mrf.mxu0
        %v2747 = vadd.f32 0.0, %v2746
        %v2748 = vpop.f32.mrf.mxu0
        %v2749 = vadd.f32 0.0, %v2748
        %2750 = vmatmul.bf16.gmra.mxu0 %v403
        %v2751 = vpop.f32.mrf.mxu0
        %v2752 = vadd.f32 0.0, %v2751
        %v2753 = vpop.f32.mrf.mxu0
        %v2754 = vadd.f32 0.0, %v2753
        %2755 = vmatmul.bf16.gmra.mxu0 %v406
        %v2756 = vpop.f32.mrf.mxu0
        %v2757 = vadd.f32 0.0, %v2756
        %v2758 = vpop.f32.mrf.mxu0
        %v2759 = vadd.f32 0.0, %v2758
        %2760 = vmatmul.bf16.gmra.mxu0 %v409
        %v2761 = vpop.f32.mrf.mxu0
        %v2762 = vadd.f32 0.0, %v2761
        %v2763 = vpop.f32.mrf.mxu0
        %v2764 = vadd.f32 0.0, %v2763
        %2765 = vmatmul.bf16.gmra.mxu0 %v412
        %v2766 = vpop.f32.mrf.mxu0
        %v2767 = vadd.f32 0.0, %v2766
        %v2768 = vpop.f32.mrf.mxu0
        %v2769 = vadd.f32 0.0, %v2768
        %2770 = vmatmul.bf16.gmra.mxu0 %v415
        %v2771 = vpop.f32.mrf.mxu0
        %v2772 = vadd.f32 0.0, %v2771
        %v2773 = vpop.f32.mrf.mxu0
        %v2774 = vadd.f32 0.0, %v2773
        %2775 = vmatmul.bf16.gmra.mxu0 %v418
        %v2776 = vpop.f32.mrf.mxu0
        %v2777 = vadd.f32 0.0, %v2776
        %v2778 = vpop.f32.mrf.mxu0
        %v2779 = vadd.f32 0.0, %v2778
        %2780 = vmatmul.bf16.gmra.mxu0 %v421
        %v2781 = vpop.f32.mrf.mxu0
        %v2782 = vadd.f32 0.0, %v2781
        %v2783 = vpop.f32.mrf.mxu0
        %v2784 = vadd.f32 0.0, %v2783
        %2785 = vmatmul.bf16.gmra.mxu0 %v424
        %v2786 = vpop.f32.mrf.mxu0
        %v2787 = vadd.f32 0.0, %v2786
        %v2788 = vpop.f32.mrf.mxu0
        %v2789 = vadd.f32 0.0, %v2788
        %2790 = vmatmul.bf16.gmra.mxu0 %v427
        %v2791 = vpop.f32.mrf.mxu0
        %v2792 = vadd.f32 0.0, %v2791
        %v2793 = vpop.f32.mrf.mxu0
        %v2794 = vadd.f32 0.0, %v2793
        %2795 = vmatmul.bf16.gmra.mxu0 %v430
        %v2796 = vpop.f32.mrf.mxu0
        %v2797 = vadd.f32 0.0, %v2796
        %v2798 = vpop.f32.mrf.mxu0
        %v2799 = vadd.f32 0.0, %v2798
        %2800 = vmatmul.bf16.gmra.mxu0 %v433
        %v2801 = vpop.f32.mrf.mxu0
        %v2802 = vadd.f32 0.0, %v2801
        %v2803 = vpop.f32.mrf.mxu0
        %v2804 = vadd.f32 0.0, %v2803
        %2805 = vmatmul.bf16.gmra.mxu0 %v436
        %v2806 = vpop.f32.mrf.mxu0
        %v2807 = vadd.f32 0.0, %v2806
        %v2808 = vpop.f32.mrf.mxu0
        %v2809 = vadd.f32 0.0, %v2808
        %2810 = vdwg.mxu0
        %v2811 = vadd.f32 %v2611, %v2732
        %v2812 = vadd.f32 %v2613, %v2734
        %v2813 = vadd.f32 %v2616, %v2737
        %v2814 = vadd.f32 %v2618, %v2739
        %v2815 = vadd.f32 %v2621, %v2742
        %v2816 = vadd.f32 %v2623, %v2744
        %v2817 = vadd.f32 %v2626, %v2747
        %v2818 = vadd.f32 %v2628, %v2749
        %v2819 = vadd.f32 %v2631, %v2752
        %v2820 = vadd.f32 %v2633, %v2754
        %v2821 = vadd.f32 %v2636, %v2757
        %v2822 = vadd.f32 %v2638, %v2759
        %v2823 = vadd.f32 %v2641, %v2762
        %v2824 = vadd.f32 %v2643, %v2764
        %v2825 = vadd.f32 %v2646, %v2767
        %v2826 = vadd.f32 %v2648, %v2769
        %v2827 = vadd.f32 %v2651, %v2772
        %v2828 = vadd.f32 %v2653, %v2774
        %v2829 = vadd.f32 %v2656, %v2777
        %v2830 = vadd.f32 %v2658, %v2779
        %v2831 = vadd.f32 %v2661, %v2782
        %v2832 = vadd.f32 %v2663, %v2784
        %v2833 = vadd.f32 %v2666, %v2787
        %v2834 = vadd.f32 %v2668, %v2789
        %v2835 = vadd.f32 %v2671, %v2792
        %v2836 = vadd.f32 %v2673, %v2794
        %v2837 = vadd.f32 %v2676, %v2797
        %v2838 = vadd.f32 %v2678, %v2799
        %v2839 = vadd.f32 %v2681, %v2802
        %v2840 = vadd.f32 %v2683, %v2804
        %v2841 = vadd.f32 %v2686, %v2807
        %v2842 = vadd.f32 %v2688, %v2809
        %v2843 = vmax.f32 %v2811, 0.0
        %v2844 = vmax.f32 %v2812, 0.0
        %v2845 = vmax.f32 %v2813, 0.0
        %v2846 = vmax.f32 %v2814, 0.0
        %v2847 = vmax.f32 %v2815, 0.0
        %v2848 = vmax.f32 %v2816, 0.0
        %v2849 = vmax.f32 %v2817, 0.0
        %v2850 = vmax.f32 %v2818, 0.0
        %v2851 = vmax.f32 %v2819, 0.0
        %v2852 = vmax.f32 %v2820, 0.0
        %v2853 = vmax.f32 %v2821, 0.0
        %v2854 = vmax.f32 %v2822, 0.0
        %v2855 = vmax.f32 %v2823, 0.0
        %v2856 = vmax.f32 %v2824, 0.0
        %v2857 = vmax.f32 %v2825, 0.0
        %v2858 = vmax.f32 %v2826, 0.0
        %v2859 = vmax.f32 %v2827, 0.0
        %v2860 = vmax.f32 %v2828, 0.0
        %v2861 = vmax.f32 %v2829, 0.0
        %v2862 = vmax.f32 %v2830, 0.0
        %v2863 = vmax.f32 %v2831, 0.0
        %v2864 = vmax.f32 %v2832, 0.0
        %v2865 = vmax.f32 %v2833, 0.0
        %v2866 = vmax.f32 %v2834, 0.0
        %v2867 = vmax.f32 %v2835, 0.0
        %v2868 = vmax.f32 %v2836, 0.0
        %v2869 = vmax.f32 %v2837, 0.0
        %v2870 = vmax.f32 %v2838, 0.0
        %v2871 = vmax.f32 %v2839, 0.0
        %v2872 = vmax.f32 %v2840, 0.0
        %v2873 = vmax.f32 %v2841, 0.0
        %v2874 = vmax.f32 %v2842, 0.0
        %v2875 = vpack.c.bf16 %v2843, %v2843
        %v2876 = vpack.c.bf16 %v2844, %v2844
        %v2877 = vpack.c.bf16 %v2845, %v2845
        %v2878 = vpack.c.bf16 %v2846, %v2846
        %v2879 = vpack.c.bf16 %v2847, %v2847
        %v2880 = vpack.c.bf16 %v2848, %v2848
        %v2881 = vpack.c.bf16 %v2849, %v2849
        %v2882 = vpack.c.bf16 %v2850, %v2850
        %v2883 = vpack.c.bf16 %v2851, %v2851
        %v2884 = vpack.c.bf16 %v2852, %v2852
        %v2885 = vpack.c.bf16 %v2853, %v2853
        %v2886 = vpack.c.bf16 %v2854, %v2854
        %v2887 = vpack.c.bf16 %v2855, %v2855
        %v2888 = vpack.c.bf16 %v2856, %v2856
        %v2889 = vpack.c.bf16 %v2857, %v2857
        %v2890 = vpack.c.bf16 %v2858, %v2858
        %v2891 = vpack.c.bf16 %v2859, %v2859
        %v2892 = vpack.c.bf16 %v2860, %v2860
        %v2893 = vpack.c.bf16 %v2861, %v2861
        %v2894 = vpack.c.bf16 %v2862, %v2862
        %v2895 = vpack.c.bf16 %v2863, %v2863
        %v2896 = vpack.c.bf16 %v2864, %v2864
        %v2897 = vpack.c.bf16 %v2865, %v2865
        %v2898 = vpack.c.bf16 %v2866, %v2866
        %v2899 = vpack.c.bf16 %v2867, %v2867
        %v2900 = vpack.c.bf16 %v2868, %v2868
        %v2901 = vpack.c.bf16 %v2869, %v2869
        %v2902 = vpack.c.bf16 %v2870, %v2870
        %v2903 = vpack.c.bf16 %v2871, %v2871
        %v2904 = vpack.c.bf16 %v2872, %v2872
        %v2905 = vpack.c.bf16 %v2873, %v2873
        %v2906 = vpack.c.bf16 %v2874, %v2874
        %2907 = vst [vmem:[%s298] sm:$0xf] %v2875
        %2908 = vst [vmem:[%s298 + $0x4] sm:$0xf] %v2876
        %2909 = vst [vmem:[%s298 + $0x8] sm:$0xf] %v2877
        %2910 = vst [vmem:[%s298 + $0xc] sm:$0xf] %v2878
        %2911 = vst [vmem:[%s298 + $0x10] sm:$0xf] %v2879
        %2912 = vst [vmem:[%s298 + $0x14] sm:$0xf] %v2880
        %2913 = vst [vmem:[%s298 + $0x18] sm:$0xf] %v2881
        %2914 = vst [vmem:[%s298 + $0x1c] sm:$0xf] %v2882
        %2915 = vst [vmem:[%s298 + $0x20] sm:$0xf] %v2883
        %2916 = vst [vmem:[%s298 + $0x24] sm:$0xf] %v2884
        %2917 = vst [vmem:[%s298 + $0x28] sm:$0xf] %v2885
        %2918 = vst [vmem:[%s298 + $0x2c] sm:$0xf] %v2886
        %2919 = vst [vmem:[%s298 + $0x30] sm:$0xf] %v2887
        %2920 = vst [vmem:[%s298 + $0x34] sm:$0xf] %v2888
        %2921 = vst [vmem:[%s298 + $0x38] sm:$0xf] %v2889
        %2922 = vst [vmem:[%s298 + $0x3c] sm:$0xf] %v2890
        %2923 = vst [vmem:[%s298 + $0x40] sm:$0xf] %v2891
        %2924 = vst [vmem:[%s298 + $0x44] sm:$0xf] %v2892
        %2925 = vst [vmem:[%s298 + $0x48] sm:$0xf] %v2893
        %2926 = vst [vmem:[%s298 + $0x4c] sm:$0xf] %v2894
        %2927 = vst [vmem:[%s298 + $0x50] sm:$0xf] %v2895
        %2928 = vst [vmem:[%s298 + $0x54] sm:$0xf] %v2896
        %2929 = vst [vmem:[%s298 + $0x58] sm:$0xf] %v2897
        %2930 = vst [vmem:[%s298 + $0x5c] sm:$0xf] %v2898
        %2931 = vst [vmem:[%s298 + $0x60] sm:$0xf] %v2899
        %2932 = vst [vmem:[%s298 + $0x64] sm:$0xf] %v2900
        %2933 = vst [vmem:[%s298 + $0x68] sm:$0xf] %v2901
        %2934 = vst [vmem:[%s298 + $0x6c] sm:$0xf] %v2902
        %2935 = vst [vmem:[%s298 + $0x70] sm:$0xf] %v2903
        %2936 = vst [vmem:[%s298 + $0x74] sm:$0xf] %v2904
        %2937 = vst [vmem:[%s298 + $0x78] sm:$0xf] %v2905
        %2938 = vst [vmem:[%s298 + $0x7c] sm:$0xf] %v2906
        %s2939 = sand.u32 %s203, 1
        %s2940 = scalar_lea.sflag [#allocation3], %s2939
        %s2941 = sand.u32 %s203, 1
        %s2942 = smul.addr %s2941, 128
        %s2943 = scalar_lea.vmem [#allocation2], %s2942
        // Predicated region
        $region53: #{tpu_custom_call.1} parent=51 // pred_check
          %p2944 = pneg %p213
        $region54: #{tpu_custom_call.1} parent=51 // pred_check_branch
          %2946 = sbr.rel (%p2944) target = $region56
        $region55: #{tpu_custom_call.1} parent=51 // pred_region
          %2948 = vsyncadd %s2940, 0
          %s2949 = smul.addr %s22, 32
          %s2950 = smul.addr %s2949, 4
          %s2951 = scalar_lea.hbm %s8, %s2950
          %s2952 = sshll.u32 %s2943, 4
          %s2953 = int_to_ptr.vmem [resolvable:$true] %s2952
          %s2954 = sshll.u32 %s2951, 4
          %s2955 = int_to_ptr.hbm [resolvable:$true] %s2954
          %2960 = dma.vmem_to_hbm [thread:$0]  %s2953, 2048, %s2955, %s2940, 64, 64, 4
        $region56: #{tpu_custom_call.1} parent=51 // pred_fallthru
          _
      $region52: #{tpu_custom_call.1} parent=5 // pred_fallthru
        _
      %p2961 = scmp.le.s32.totalorder 2, %s17
      // Predicated region
      $region57: #{tpu_custom_call.1} parent=5 // pred_check
        %p2962 = pneg %p2961
      $region58: #{tpu_custom_call.1} parent=5 // pred_check_branch
        %2964 = sbr.rel (%p2962) target = $region60
      $region59: #{tpu_custom_call.1} parent=5 // pred_region
        %s2965 = ssub.s32 %s17, 2
        // Predicated region
        $region61: #{tpu_custom_call.1} parent=59 // pred_check
          %p2966 = pneg %p219
        $region62: #{tpu_custom_call.1} parent=59 // pred_check_branch
          %2968 = sbr.rel (%p2966) target = $region64
        $region63: #{tpu_custom_call.1} parent=59 // pred_region
          %s2969 = sand.u32 %s204, 1
          %s2970 = scalar_lea.sflag [#allocation3], %s2969
          %s2971 = sand.u32 %s204, 1
          %s2972 = smul.addr %s2971, 128
          %s2973 = scalar_lea.vmem [#allocation2], %s2972
          %2975 = dma.done %s2970, 2048
        $region64: #{tpu_custom_call.1} parent=59 // pred_fallthru
          _
      $region60: #{tpu_custom_call.1} parent=5 // pred_fallthru
        _
    $region6: #{tpu_custom_call.1} parent=1 // loop_footer
      %s21 = sadd.s32 1, %s17
    $region7: #{tpu_custom_call.1} parent=1 // loop_footer_branch
      %16 = sbr.rel target = $region3
    $region8: #{tpu_custom_call.1} parent=1 // loop_exit
      _
    %2976 = vsyncpa [#allocation3], 1
    %s2977 = scalar_lea.sflag [#allocation3], 1
    %2978 = vsyncpa %s2977, 1

</llo_original>
